<compile_context>
chip_gen: v6e
topology: v6e:2x2x1
jax: 0.10.0
libtpu: 0.0.40
codegen_flags: <defaults>
</compile_context>

<pallas_src>
import functools

import jax
import jax.numpy as jnp
from jax.experimental import pallas as pl
from jax.experimental.pallas import tpu as pltpu


def _round_up(x, m):
    return (x + m - 1) // m * m


def _dyrelu_coefs_kernel(x_ref, w1_ref, b1_ref, w2_ref, b2_ref, out_ref,
                         acc_ref, *, inv_t, t_rem):
    # x_ref : [b_tile, t_tile, C]   (input dtype, possibly bf16)
    # w1    : [C, H]     b1 : [1, H]
    # w2    : [H, 2k]    b2 : [1, 2k]
    # out   : [b_tile, 2k]
    # acc   : [b_tile, C] f32 scratch, persistent across the T grid axis.
    t = pl.program_id(1)
    nt = pl.num_programs(1)

    @pl.when(t == 0)
    def _init():
        acc_ref[...] = jnp.zeros_like(acc_ref)

    if t_rem == 0:
        # T is a multiple of the time tile: every tile is full, no masking.
        acc_ref[...] += jnp.sum(x_ref[...], axis=1, dtype=jnp.float32)
    else:
        @pl.when(t < nt - 1)
        def _acc_full():
            acc_ref[...] += jnp.sum(x_ref[...], axis=1, dtype=jnp.float32)

        @pl.when(t == nt - 1)
        def _acc_partial():
            # Trailing T tile: rows >= t_rem are boundary-block garbage and
            # MUST be zeroed before they enter the (valid) batch rows' sums.
            xv = x_ref[...]
            rows = jax.lax.broadcasted_iota(jnp.int32, xv.shape, 1)
            xv = jnp.where(rows < t_rem, xv, jnp.zeros_like(xv))
            acc_ref[...] += jnp.sum(xv, axis=1, dtype=jnp.float32)

    @pl.when(t == nt - 1)
    def _finalize():
        # mean = sum * (1/T); 1/T uses the true (unpadded) T.
        theta = acc_ref[...] * inv_t                                   # [b, C]
        h = jnp.dot(theta, w1_ref[...],
                    preferred_element_type=jnp.float32) + b1_ref[...]
        h = jnp.maximum(h, 0.0)                                        # [b, H]
        z = jnp.dot(h, w2_ref[...],
                    preferred_element_type=jnp.float32) + b2_ref[...]  # [b,2k]
        out_ref[...] = (2.0 * jax.nn.sigmoid(z) - 1.0).astype(out_ref.dtype)


def dyrelu_get_relu_coefs(x, w1, b1, w2, b2, *, b_tile=None, t_tile=None,
                          target_tile_bytes=6 << 20):
    """Pallas wrapper for DyReLU.get_relu_coefs.

    x  : [B, T, C]  float32 or bfloat16
    w1 : [C, H],  b1 : [H] or [1, H]        (H = C // reduction)
    w2 : [H, 2k], b2 : [2k] or [1, 2k]
    returns theta : [B, 2k] float32
    """
    B, T, C = x.shape
    H = w1.shape[1]
    two_k = w2.shape[1]
    itemsize = jnp.dtype(x.dtype).itemsize

    # Lane/sublane *accounting* only — the data itself is not padded.
    C_lane = _round_up(C, 128)
    t_gran = 8 * max(1, 4 // itemsize)     # 8 (f32), 16 (bf16), 32 (i8/fp8)

    # ---- batch tile: multiple of 8 (sublane dim of acc/out blocks);
    # guarantee >= 2 batch tiles when B > 8 so the "parallel" batch grid axis
    # can feed both TensorCores on v7x.
    B8 = _round_up(B, 8)
    if b_tile is None:
        b_tile = min(64, B8)
    b_tile = max(8, (min(b_tile, B8) // 8) * 8)
    if B > 8:
        b_tile = min(b_tile, max(8, (B8 // 2) // 8 * 8))

    # ---- time tile: sized so one x tile is ~target_tile_bytes, rounded to
    # the dtype packing granule.  A full-dim time block is used when it fits.
    if t_tile is None:
        t_budget = target_tile_bytes // (b_tile * C_lane * itemsize)
        t_budget = max(t_gran, (t_budget // t_gran) * t_gran)
        t_tile = T if t_budget >= T else t_budget
    else:
        if t_tile >= T:
            t_tile = T                      # full-dim block (always legal)
        else:
            t_tile = max(t_gran, (t_tile // t_gran) * t_gran)

    grid = (pl.cdiv(B, b_tile), pl.cdiv(T, t_tile))
    t_rem = T % t_tile
    inv_t = 1.0 / float(T)

    kernel = functools.partial(_dyrelu_coefs_kernel, inv_t=inv_t, t_rem=t_rem)

    # Biases as 2-D rows for clean broadcasting in VMEM.
    b1_2d = b1.reshape(1, H)
    b2_2d = b2.reshape(1, two_k)

    # ---- VMEM budget & cost hint (generation-aware) -------------------------
    H_lane = _round_up(H, 128)
    k_lane = _round_up(two_k, 128)
    t_tile_pad = _round_up(t_tile, t_gran)
    x_tile_bytes = b_tile * t_tile_pad * C_lane * itemsize
    w_bytes = (C_lane * H_lane + H_lane + H_lane * k_lane + k_lane) * 4
    vmem_need = (2 * x_tile_bytes                         # double-buffered x
                 + (b_tile * t_tile_pad * C_lane * 4      # f32 widen (sub-f32)
                    if itemsize < 4 else 0)
                 + 2 * w_bytes                            # resident weights
                 + b_tile * C_lane * 4                    # accumulator scratch
                 + 2 * b_tile * k_lane * 4                # output block
                 + (4 << 20))                             # headroom
    try:
        phys_vmem = getattr(pltpu.get_tpu_info(), "vmem_capacity_bytes",
                            64 << 20)
    except Exception:
        phys_vmem = 64 << 20                              # conservative (v7x)
    vmem_cap = int(phys_vmem * 0.65)
    vmem_limit = int(min(max(vmem_need, 16 << 20), vmem_cap))

    cost = pl.CostEstimate(
        flops=B * T * C + 2 * B * C * H + 2 * B * H * two_k,
        transcendentals=B * two_k,
        bytes_accessed=B * T * C * itemsize + w_bytes + B * two_k * 4,
    )

    out = pl.pallas_call(
        kernel,
        out_shape=jax.ShapeDtypeStruct((B, two_k), jnp.float32),
        grid_spec=pltpu.PrefetchScalarGridSpec(
            num_scalar_prefetch=0,
            grid=grid,
            in_specs=[
                # Only x is tiled; weights/biases stay resident (same block
                # index every grid step -> DMA'd once).
                pl.BlockSpec((b_tile, t_tile, C), lambda b, t: (b, t, 0)),
                pl.BlockSpec((C, H), lambda b, t: (0, 0)),
                pl.BlockSpec((1, H), lambda b, t: (0, 0)),
                pl.BlockSpec((H, two_k), lambda b, t: (0, 0)),
                pl.BlockSpec((1, two_k), lambda b, t: (0, 0)),
            ],
            out_specs=pl.BlockSpec((b_tile, two_k), lambda b, t: (b, 0)),
            scratch_shapes=[pltpu.VMEM((b_tile, C), jnp.float32)],
        ),
        compiler_params=pltpu.CompilerParams(
            dimension_semantics=("parallel", "arbitrary"),
            vmem_limit_bytes=vmem_limit,
        ),
        cost_estimate=cost,
    )(x, w1, b1_2d, w2, b2_2d)

    return out


def _reference(x, w1, b1, w2, b2):
    theta = jnp.mean(x.astype(jnp.float32), axis=-2)
    theta = jnp.maximum(theta @ w1 + b1.reshape(1, -1), 0.0)
    theta = theta @ w2 + b2.reshape(1, -1)
    return 2.0 * jax.nn.sigmoid(theta) - 1.0


if __name__ == "__main__":
    # Conformer-like hyper-params: DyReLU(channels=256, reduction=4, k=2).
    # B/T are non-multiples of the tiles to exercise the ragged-B boundary
    # block and the in-kernel masking of the trailing T tile.
    channels, reduction, k = 256, 4, 2
    hidden = channels // reduction            # 64
    B, T = 10, 200

    key = jax.random.PRNGKey(0)
    kx, k1w, k1b, k2w, k2b = jax.random.split(key, 5)

    # Input: [B, T, C] channel-last.
    x = jax.random.normal(kx, (B, T, channels), dtype=jnp.float32)

    # nn.Linear-style init (uniform +/- 1/sqrt(fan_in)).
    lim1 = 1.0 / jnp.sqrt(channels)
    w1 = jax.random.uniform(k1w, (channels, hidden), minval=-lim1, maxval=lim1,
                            dtype=jnp.float32)
    b1 = jax.random.uniform(k1b, (hidden,), minval=-lim1, maxval=lim1,
                            dtype=jnp.float32)
    lim2 = 1.0 / jnp.sqrt(hidden)
    w2 = jax.random.uniform(k2w, (hidden, 2 * k), minval=-lim2, maxval=lim2,
                            dtype=jnp.float32)
    b2 = jax.random.uniform(k2b, (2 * k,), minval=-lim2, maxval=lim2,
                            dtype=jnp.float32)

    # Module buffers (unused by get_relu_coefs; kept for completeness).
    lambdas = jnp.array([1.0] * k + [0.5] * k, dtype=jnp.float32)
    init_v = jnp.array([1.0] + [0.0] * (2 * k - 1), dtype=jnp.float32)

    ref = _reference(x, w1, b1, w2, b2)

    # f32, forced t_tile=64: 4-step time reduction, masked trailing T tile
    # (200 % 64 == 8) and 2 batch tiles (ragged trailing B block).
    out = dyrelu_get_relu_coefs(x, w1, b1, w2, b2, t_tile=64)
    out = jax.block_until_ready(out)
    assert out.shape == (B, 2 * k)
    assert jnp.allclose(out, ref, atol=2e-3, rtol=2e-3), (out, ref)

    # f32, default tiling (single full-T tile, no masking path).
    out_d = jax.block_until_ready(dyrelu_get_relu_coefs(x, w1, b1, w2, b2))
    assert jnp.allclose(out_d, ref, atol=2e-3, rtol=2e-3), (out_d, ref)

    # bf16-input path: half the HBM bytes, f32 accumulation inside the kernel.
    x_bf16 = x.astype(jnp.bfloat16)
    out_bf = jax.block_until_ready(
        dyrelu_get_relu_coefs(x_bf16, w1, b1, w2, b2))
    ref_bf = _reference(x_bf16, w1, b1, w2, b2)
    assert jnp.allclose(out_bf, ref_bf, atol=5e-3, rtol=5e-3), (out_bf, ref_bf)

    print("KERNEL_OK")
</pallas_src>

<mosaic_0001>
module attributes {stable_mosaic.version = 11 : i64} {
  func.func @_dyrelu_coefs_kernel(%arg0: i32, %arg1: i32, %arg2: memref<8x64x256xf32, #tpu.memory_space<vmem>>, %arg3: memref<256x64xf32, #tpu.memory_space<vmem>>, %arg4: memref<1x64xf32, #tpu.memory_space<vmem>>, %arg5: memref<64x4xf32, #tpu.memory_space<vmem>>, %arg6: memref<1x4xf32, #tpu.memory_space<vmem>>, %arg7: memref<8x4xf32, #tpu.memory_space<vmem>>, %arg8: memref<8x256xf32, #tpu.memory_space<vmem>>) attributes {dimension_semantics = [#tpu.dimension_semantics<parallel>, #tpu.dimension_semantics<arbitrary>], iteration_bounds = array<i64: 2, 4>, scalar_prefetch = 0 : i64, scratch_operands = 1 : i64, tpu.core_type = #tpu.core_type<tc>, window_params = [{transform_indices = @transform_0, window_bounds = array<i64: 8, 64, 256>}, {pipeline_mode = #tpu.pipeline_mode<synchronous>, transform_indices = @transform_1, window_bounds = array<i64: 256, 64>}, {pipeline_mode = #tpu.pipeline_mode<synchronous>, transform_indices = @transform_2, window_bounds = array<i64: 1, 64>}, {pipeline_mode = #tpu.pipeline_mode<synchronous>, transform_indices = @transform_3, window_bounds = array<i64: 64, 4>}, {pipeline_mode = #tpu.pipeline_mode<synchronous>, transform_indices = @transform_4, window_bounds = array<i64: 1, 4>}, {transform_indices = @transform_5, window_bounds = array<i64: 8, 4>}]} {
    %c0_i32 = arith.constant 0 : i32
    %0 = arith.cmpi eq, %arg1, %c0_i32 : i32
    %1 = arith.extui %0 : i1 to i32
    %c0_i32_0 = arith.constant 0 : i32
    %2 = arith.cmpi ne, %1, %c0_i32_0 : i32
    scf.if %2 {
      %cst = arith.constant 0.000000e+00 : f32
      %12 = vector.broadcast %cst : f32 to vector<8x256xf32>
      %c0 = arith.constant 0 : index
      %c0_6 = arith.constant 0 : index
      %13 = vector.load %arg8[%c0, %c0_6] : memref<8x256xf32, #tpu.memory_space<vmem>>, vector<8x256xf32>
      tpu.vector_store %arg8[%c0, %c0_6], %12 {strides = array<i32>} : memref<8x256xf32, #tpu.memory_space<vmem>>, vector<8x256xf32>,
    } else {
    }
    %c3_i32 = arith.constant 3 : i32
    %3 = arith.cmpi slt, %arg1, %c3_i32 : i32
    %4 = arith.extui %3 : i1 to i32
    %c0_i32_1 = arith.constant 0 : i32
    %5 = arith.cmpi ne, %4, %c0_i32_1 : i32
    scf.if %5 {
      %c0 = arith.constant 0 : index
      %c0_6 = arith.constant 0 : index
      %12 = vector.load %arg8[%c0, %c0_6] : memref<8x256xf32, #tpu.memory_space<vmem>>, vector<8x256xf32>
      %c0_7 = arith.constant 0 : index
      %c0_8 = arith.constant 0 : index
      %c0_9 = arith.constant 0 : index
      %13 = vector.load %arg2[%c0_7, %c0_8, %c0_9] : memref<8x64x256xf32, #tpu.memory_space<vmem>>, vector<8x64x256xf32>
      %cst = arith.constant dense<0.000000e+00> : vector<8x256xf32>
      %14 = vector.multi_reduction <add>, %13, %cst [1] : vector<8x64x256xf32> to vector<8x256xf32>
      %15 = arith.addf %12, %14 : vector<8x256xf32>
      %c0_10 = arith.constant 0 : index
      %c0_11 = arith.constant 0 : index
      %16 = vector.load %arg8[%c0_10, %c0_11] : memref<8x256xf32, #tpu.memory_space<vmem>>, vector<8x256xf32>
      tpu.vector_store %arg8[%c0_10, %c0_11], %15 {strides = array<i32>} : memref<8x256xf32, #tpu.memory_space<vmem>>, vector<8x256xf32>,
    } else {
    }
    %c3_i32_2 = arith.constant 3 : i32
    %6 = arith.cmpi eq, %arg1, %c3_i32_2 : i32
    %7 = arith.extui %6 : i1 to i32
    %c0_i32_3 = arith.constant 0 : i32
    %8 = arith.cmpi ne, %7, %c0_i32_3 : i32
    scf.if %8 {
      %c0 = arith.constant 0 : index
      %c0_6 = arith.constant 0 : index
      %c0_7 = arith.constant 0 : index
      %12 = vector.load %arg2[%c0, %c0_6, %c0_7] : memref<8x64x256xf32, #tpu.memory_space<vmem>>, vector<8x64x256xf32>
      %13 = tpu.iota {dimensions = array<i32: 1>} : vector<8x64x256xi32>
      %c8_i32 = arith.constant 8 : i32
      %14 = vector.broadcast %c8_i32 : i32 to vector<8x64x256xi32>
      %15 = arith.cmpi slt, %13, %14 : vector<8x64x256xi32>
      %cst = arith.constant 0.000000e+00 : f32
      %16 = vector.broadcast %cst : f32 to vector<8x64x256xf32>
      %17 = arith.select %15, %12, %16 : vector<8x64x256xi1>, vector<8x64x256xf32>
      %c0_8 = arith.constant 0 : index
      %c0_9 = arith.constant 0 : index
      %18 = vector.load %arg8[%c0_8, %c0_9] : memref<8x256xf32, #tpu.memory_space<vmem>>, vector<8x256xf32>
      %cst_10 = arith.constant dense<0.000000e+00> : vector<8x256xf32>
      %19 = vector.multi_reduction <add>, %17, %cst_10 [1] : vector<8x64x256xf32> to vector<8x256xf32>
      %20 = arith.addf %18, %19 : vector<8x256xf32>
      %c0_11 = arith.constant 0 : index
      %c0_12 = arith.constant 0 : index
      %21 = vector.load %arg8[%c0_11, %c0_12] : memref<8x256xf32, #tpu.memory_space<vmem>>, vector<8x256xf32>
      tpu.vector_store %arg8[%c0_11, %c0_12], %20 {strides = array<i32>} : memref<8x256xf32, #tpu.memory_space<vmem>>, vector<8x256xf32>,
    } else {
    }
    %c3_i32_4 = arith.constant 3 : i32
    %9 = arith.cmpi eq, %arg1, %c3_i32_4 : i32
    %10 = arith.extui %9 : i1 to i32
    %c0_i32_5 = arith.constant 0 : i32
    %11 = arith.cmpi ne, %10, %c0_i32_5 : i32
    scf.if %11 {
      %c0 = arith.constant 0 : index
      %c0_6 = arith.constant 0 : index
      %12 = vector.load %arg8[%c0, %c0_6] : memref<8x256xf32, #tpu.memory_space<vmem>>, vector<8x256xf32>
      %cst = arith.constant 5.000000e-03 : f32
      %13 = vector.broadcast %cst : f32 to vector<8x256xf32>
      %14 = arith.mulf %12, %13 : vector<8x256xf32>
      %c0_7 = arith.constant 0 : index
      %c0_8 = arith.constant 0 : index
      %15 = vector.load %arg3[%c0_7, %c0_8] : memref<256x64xf32, #tpu.memory_space<vmem>>, vector<256x64xf32>
      %cst_9 = arith.constant dense<0.000000e+00> : vector<8x64xf32>
      %16 = tpu.matmul %14, %15, %cst_9 {dimension_numbers = #tpu.dot_dimension_numbers<[1], [0], [0], [1], [0, 0, 1, 1], [], []>} : vector<8x256xf32>, vector<256x64xf32>, vector<8x64xf32> -> vector<8x64xf32>
      %c0_10 = arith.constant 0 : index
      %c0_11 = arith.constant 0 : index
      %17 = vector.load %arg4[%c0_10, %c0_11] : memref<1x64xf32, #tpu.memory_space<vmem>>, vector<1x64xf32>
      %18 = vector.broadcast %17 : vector<1x64xf32> to vector<8x64xf32>
      %19 = arith.addf %16, %18 : vector<8x64xf32>
      %cst_12 = arith.constant 0.000000e+00 : f32
      %20 = vector.broadcast %cst_12 : f32 to vector<8x64xf32>
      %21 = arith.maximumf %19, %20 : vector<8x64xf32>
      %c0_13 = arith.constant 0 : index
      %c0_14 = arith.constant 0 : index
      %22 = vector.load %arg5[%c0_13, %c0_14] : memref<64x4xf32, #tpu.memory_space<vmem>>, vector<64x4xf32>
      %cst_15 = arith.constant dense<0.000000e+00> : vector<8x4xf32>
      %23 = tpu.matmul %21, %22, %cst_15 {dimension_numbers = #tpu.dot_dimension_numbers<[1], [0], [0], [1], [0, 0, 1, 1], [], []>} : vector<8x64xf32>, vector<64x4xf32>, vector<8x4xf32> -> vector<8x4xf32>
      %c0_16 = arith.constant 0 : index
      %c0_17 = arith.constant 0 : index
      %24 = vector.load %arg6[%c0_16, %c0_17] : memref<1x4xf32, #tpu.memory_space<vmem>>, vector<1x4xf32>
      %25 = vector.broadcast %24 : vector<1x4xf32> to vector<8x4xf32>
      %26 = arith.addf %23, %25 : vector<8x4xf32>
      %27 = arith.negf %26 : vector<8x4xf32>
      %28 = math.exp %27 : vector<8x4xf32>
      %cst_18 = arith.constant 1.000000e+00 : f32
      %29 = vector.broadcast %cst_18 : f32 to vector<8x4xf32>
      %30 = arith.addf %29, %28 : vector<8x4xf32>
      %31 = arith.divf %29, %30 : vector<8x4xf32>
      %cst_19 = arith.constant 2.000000e+00 : f32
      %32 = vector.broadcast %cst_19 : f32 to vector<8x4xf32>
      %33 = arith.mulf %32, %31 : vector<8x4xf32>
      %cst_20 = arith.constant 1.000000e+00 : f32
      %34 = vector.broadcast %cst_20 : f32 to vector<8x4xf32>
      %35 = arith.subf %33, %34 : vector<8x4xf32>
      %c0_21 = arith.constant 0 : index
      %c0_22 = arith.constant 0 : index
      %36 = vector.load %arg7[%c0_21, %c0_22] : memref<8x4xf32, #tpu.memory_space<vmem>>, vector<8x4xf32>
      tpu.vector_store %arg7[%c0_21, %c0_22], %35 {strides = array<i32>} : memref<8x4xf32, #tpu.memory_space<vmem>>, vector<8x4xf32>,
    } else {
    }
    return
  }
  func.func @transform_0(%arg0: i32, %arg1: i32) -> (i32, i32, i32) {
    %c0_i32 = arith.constant 0 : i32
    %c0_i32_0 = arith.constant 0 : i32
    return %arg0, %arg1, %c0_i32 : i32, i32, i32
  }
  func.func @transform_1(%arg0: i32, %arg1: i32) -> (i32, i32) {
    %c0_i32 = arith.constant 0 : i32
    %c0_i32_0 = arith.constant 0 : i32
    %c0_i32_1 = arith.constant 0 : i32
    return %c0_i32, %c0_i32_0 : i32, i32
  }
  func.func @transform_2(%arg0: i32, %arg1: i32) -> (i32, i32) {
    %c0_i32 = arith.constant 0 : i32
    %c0_i32_0 = arith.constant 0 : i32
    %c0_i32_1 = arith.constant 0 : i32
    return %c0_i32, %c0_i32_0 : i32, i32
  }
  func.func @transform_3(%arg0: i32, %arg1: i32) -> (i32, i32) {
    %c0_i32 = arith.constant 0 : i32
    %c0_i32_0 = arith.constant 0 : i32
    %c0_i32_1 = arith.constant 0 : i32
    return %c0_i32, %c0_i32_0 : i32, i32
  }
  func.func @transform_4(%arg0: i32, %arg1: i32) -> (i32, i32) {
    %c0_i32 = arith.constant 0 : i32
    %c0_i32_0 = arith.constant 0 : i32
    %c0_i32_1 = arith.constant 0 : i32
    return %c0_i32, %c0_i32_0 : i32, i32
  }
  func.func @transform_5(%arg0: i32, %arg1: i32) -> (i32, i32) {
    %c0_i32 = arith.constant 0 : i32
    %c0_i32_0 = arith.constant 0 : i32
    return %arg0, %c0_i32 : i32, i32
  }
}

</mosaic_0001>

<llo_original>
// kernel: tpu_custom_call.1
$region0: #{tpu_custom_call.1}
  #allocation0 [shape = 'u32[]', space=smem, size = 0x4, offset = 0x4, fixed_abs, tag = 'smem constant byte address 0x4 - core index']
  #allocation1 [shape = 'u32[144,128]{1,0:T(1,128)}', space=vmem, size = 0x12000, scoped, tag = 'internal scratch']
  #allocation2 [shape = 'f32[8,256]{1,0:T(8,128)}', space=vmem, size = 0x2000, scoped, tag = 'scratch operand']
  #allocation8 [shape = 's32[]', space=sflag, size = 0x4, offset = 0, fixed_abs, tag = 'sflag constant byte address 0x0 - dummy sync flag']
  %s0 = inlined_call_operand.hbm [shape: f32[10,200,256], index: 0, kind: input, shape index: {}]
  %s1 = inlined_call_operand.vmem [shape: f32[256,64], index: 1, kind: input, shape index: {}]
  %s2 = inlined_call_operand.hbm [shape: f32[1,64], index: 2, kind: input, shape index: {}]
  %s3 = inlined_call_operand.vmem [shape: f32[64,4], index: 3, kind: input, shape index: {}]
  %s4 = inlined_call_operand.hbm [shape: f32[1,4], index: 4, kind: input, shape index: {}]
  %s5 = inlined_call_operand.vmem [shape: f32[10,4], index: 5, kind: output, shape index: {}]
  %s6 = sld [smem:[#allocation0]]
  $region77: #{tpu_custom_call.1} parent=0
    _
  %s8 = ssub.s32 1, %s6
  %s9 = scalar_select 0, %s8, %s6
  $region1: #{tpu_custom_call.1} parent=0
    #allocation3 [shape = 'u8[1048576]{0}', space=vmem, size = 0x100000, scoped, tag = 'input window, operand 0']
    #allocation4 [shape = 's32[2]{0}', space=sflag, size = 0x8, scoped, tag = 'scoped memory for tpu_custom_call.1']
    #allocation5 [shape = 'u8[512]{0}', space=vmem, size = 0x400, scoped, tag = 'input window, operand 2, single buffered']
    #allocation6 [shape = 's32[1]{0}', space=sflag, size = 0x4, scoped, tag = 'scoped memory for tpu_custom_call.1']
    #allocation7 [shape = 'u8[512]{0}', space=vmem, size = 0x400, scoped, tag = 'input window, operand 4, single buffered']
    %10 = vsyncpa [#allocation4], 0
    %s11 = scalar_lea.sflag [#allocation4], 1
    %12 = vsyncpa %s11, 0
    %13 = vsyncpa [#allocation6], 0
    loop: start=0, step=1, limit=10
    $region2: #{tpu_custom_call.1} parent=1 // loop_pre_header
      _
    $region3: #{tpu_custom_call.1} parent=1 // loop_header
      %s15 = sphi 0, %s19
      %p16 = scmp.ge.s32.totalorder %s15, 10
      %s22 = sphi 0, %s34
      %s23 = sphi 0, %s30
      %s24 = sphi 0, %s22
      %s25 = sphi 0, %s23
      %s26 = sphi 0, %s24
      %s27 = sphi 0, %s25
      %s39 = sphi 0, %s41
      %s42 = sphi 0, %s39
      %s43 = sphi 0, %s42
      %s59 = sphi 0, %s43
      %s63 = sphi 0, %s63
      %s65 = sphi 0, %s63
      %s66 = sphi 0, %s65
      %s80 = sphi 0, %s66
      %s84 = sphi 0, %s84
      %s86 = sphi 0, %s84
      %s87 = sphi 0, %s86
      %s101 = sphi 0, %s87
      %s105 = sphi 0, %s105
      %s107 = sphi 0, %s105
      %s108 = sphi 0, %s107
      %s122 = sphi 0, %s108
      %s126 = sphi 0, %s126
      %s128 = sphi 0, %s126
      %s129 = sphi 0, %s128
      %s143 = sphi 0, %s129
      %s149 = sphi 0, %s151
      %s152 = sphi 0, %s149
      %s153 = sphi 0, %s152
      %s169 = sphi 0, %s153
    $region4: #{tpu_custom_call.1} parent=1 // loop_header_branch
      %18 = sbr.rel (%p16) target = $region8
    $region5: #{tpu_custom_call.1} parent=1 // loop_body
      %s20 = ssub.s32 %s15, 1
      %s21 = ssub.s32 %s15, 2
      %s28 = sadd.s32 1, %s23
      %p29 = scmp.ge.s32.totalorder %s28, 4
      %s30 = scalar_select %p29, 0, %s28
      %s31 = sadd.s32 1, %s22
      %s32 = scalar_select %p29, %s31, %s22
      %p33 = scmp.ge.s32.totalorder %s32, 2
      %s34 = scalar_select %p33, 0, %s32
      %s35 = ssub.s32 %s22, %s34
      %s36 = ssub.s32 %s23, %s30
      %s37 = sor.u32 %s35, %s36
      %p38 = scmp.eq.s32.totalorder %s37, 0
      %s40 = sadd.s32 %s39, 1
      %s41 = scalar_select %p38, %s39, %s40
      %p44 = pneg %p38
      %p45 = scmp.eq.s32.totalorder %s15, 7
      %p46 = por %p44, %p45
      %p47 = scmp.ne.s32.totalorder %s39, %s42
      %p48 = scmp.eq.s32.totalorder %s15, 0
      %p49 = por %p47, %p48
      %p50 = scmp.ne.s32.totalorder %s39, %s42
      %p51 = scmp.eq.s32.totalorder %s20, 7
      %p52 = por %p50, %p51
      %p53 = scmp.ne.s32.totalorder %s42, %s43
      %p54 = scmp.eq.s32.totalorder %s20, 0
      %p55 = por %p53, %p54
      %p56 = scmp.ne.s32.totalorder %s42, %s43
      %p57 = scmp.eq.s32.totalorder %s21, 7
      %p58 = por %p56, %p57
      %p60 = scmp.ne.s32.totalorder %s43, %s59
      %p61 = scmp.eq.s32.totalorder %s21, 0
      %p62 = por %p60, %p61
      %s64 = sadd.s32 %s63, 1
      %p67 = scmp.eq.s32.totalorder %s15, 7
      %p68 = scmp.ne.s32.totalorder %s63, %s65
      %p69 = scmp.eq.s32.totalorder %s15, 0
      %p70 = por %p68, %p69
      %p71 = scmp.ne.s32.totalorder %s63, %s65
      %p72 = scmp.eq.s32.totalorder %s20, 7
      %p73 = por %p71, %p72
      %p74 = scmp.ne.s32.totalorder %s65, %s66
      %p75 = scmp.eq.s32.totalorder %s20, 0
      %p76 = por %p74, %p75
      %p77 = scmp.ne.s32.totalorder %s65, %s66
      %p78 = scmp.eq.s32.totalorder %s21, 7
      %p79 = por %p77, %p78
      %p81 = scmp.ne.s32.totalorder %s66, %s80
      %p82 = scmp.eq.s32.totalorder %s21, 0
      %p83 = por %p81, %p82
      %s85 = sadd.s32 %s84, 1
      %p88 = scmp.eq.s32.totalorder %s15, 7
      %p89 = scmp.ne.s32.totalorder %s84, %s86
      %p90 = scmp.eq.s32.totalorder %s15, 0
      %p91 = por %p89, %p90
      %p92 = scmp.ne.s32.totalorder %s84, %s86
      %p93 = scmp.eq.s32.totalorder %s20, 7
      %p94 = por %p92, %p93
      %p95 = scmp.ne.s32.totalorder %s86, %s87
      %p96 = scmp.eq.s32.totalorder %s20, 0
      %p97 = por %p95, %p96
      %p98 = scmp.ne.s32.totalorder %s86, %s87
      %p99 = scmp.eq.s32.totalorder %s21, 7
      %p100 = por %p98, %p99
      %p102 = scmp.ne.s32.totalorder %s87, %s101
      %p103 = scmp.eq.s32.totalorder %s21, 0
      %p104 = por %p102, %p103
      %s106 = sadd.s32 %s105, 1
      %p109 = scmp.eq.s32.totalorder %s15, 7
      %p110 = scmp.ne.s32.totalorder %s105, %s107
      %p111 = scmp.eq.s32.totalorder %s15, 0
      %p112 = por %p110, %p111
      %p113 = scmp.ne.s32.totalorder %s105, %s107
      %p114 = scmp.eq.s32.totalorder %s20, 7
      %p115 = por %p113, %p114
      %p116 = scmp.ne.s32.totalorder %s107, %s108
      %p117 = scmp.eq.s32.totalorder %s20, 0
      %p118 = por %p116, %p117
      %p119 = scmp.ne.s32.totalorder %s107, %s108
      %p120 = scmp.eq.s32.totalorder %s21, 7
      %p121 = por %p119, %p120
      %p123 = scmp.ne.s32.totalorder %s108, %s122
      %p124 = scmp.eq.s32.totalorder %s21, 0
      %p125 = por %p123, %p124
      %s127 = sadd.s32 %s126, 1
      %p130 = scmp.eq.s32.totalorder %s15, 7
      %p131 = scmp.ne.s32.totalorder %s126, %s128
      %p132 = scmp.eq.s32.totalorder %s15, 0
      %p133 = por %p131, %p132
      %p134 = scmp.ne.s32.totalorder %s126, %s128
      %p135 = scmp.eq.s32.totalorder %s20, 7
      %p136 = por %p134, %p135
      %p137 = scmp.ne.s32.totalorder %s128, %s129
      %p138 = scmp.eq.s32.totalorder %s20, 0
      %p139 = por %p137, %p138
      %p140 = scmp.ne.s32.totalorder %s128, %s129
      %p141 = scmp.eq.s32.totalorder %s21, 7
      %p142 = por %p140, %p141
      %p144 = scmp.ne.s32.totalorder %s129, %s143
      %p145 = scmp.eq.s32.totalorder %s21, 0
      %p146 = por %p144, %p145
      %s147 = ssub.s32 %s22, %s34
      %p148 = scmp.eq.s32.totalorder %s147, 0
      %s150 = sadd.s32 %s149, 1
      %s151 = scalar_select %p148, %s149, %s150
      %p154 = pneg %p148
      %p155 = scmp.eq.s32.totalorder %s15, 7
      %p156 = por %p154, %p155
      %p157 = scmp.ne.s32.totalorder %s149, %s152
      %p158 = scmp.eq.s32.totalorder %s15, 0
      %p159 = por %p157, %p158
      %p160 = scmp.ne.s32.totalorder %s149, %s152
      %p161 = scmp.eq.s32.totalorder %s20, 7
      %p162 = por %p160, %p161
      %p163 = scmp.ne.s32.totalorder %s152, %s153
      %p164 = scmp.eq.s32.totalorder %s20, 0
      %p165 = por %p163, %p164
      %p166 = scmp.ne.s32.totalorder %s152, %s153
      %p167 = scmp.eq.s32.totalorder %s21, 7
      %p168 = por %p166, %p167
      %p170 = scmp.ne.s32.totalorder %s153, %s169
      %p171 = scmp.eq.s32.totalorder %s21, 0
      %p172 = por %p170, %p171
      %p173 = scmp.le.s32.totalorder 1, %s15
      %p174 = scmp.lt.s32.totalorder %s15, 9
      %p175 = pnand %p173, %p174
      %p176 = pneg %p175
      // Predicated region
      $region9: #{tpu_custom_call.1} parent=5 // pred_check
        _
      $region10: #{tpu_custom_call.1} parent=5 // pred_check_branch
        %178 = sbr.rel (%p175) target = $region12
      $region11: #{tpu_custom_call.1} parent=5 // pred_region
        %s179 = ssub.s32 %s15, 1
        // Predicated region
        $region13: #{tpu_custom_call.1} parent=11 // pred_check
          %p180 = pneg %p76
        $region14: #{tpu_custom_call.1} parent=11 // pred_check_branch
          %182 = sbr.rel (%p180) target = $region16
        $region15: #{tpu_custom_call.1} parent=11 // pred_region
          _
        $region16: #{tpu_custom_call.1} parent=11 // pred_fallthru
          _
        // Predicated region
        $region17: #{tpu_custom_call.1} parent=11 // pred_check
          %p183 = pneg %p97
        $region18: #{tpu_custom_call.1} parent=11 // pred_check_branch
          %185 = sbr.rel (%p183) target = $region20
        $region19: #{tpu_custom_call.1} parent=11 // pred_region
          %s187 = ssub.s32 16, 16
          %188 = vsyncadd [#allocation6], %s187
          %s190 = sshll.u32 [#allocation5], 4
          %s191 = int_to_ptr.vmem [resolvable:$true] %s190
          %193 = dma.hbm_to_vmem [thread:$0]  %s2, 16, %s191, [#allocation6]
        $region20: #{tpu_custom_call.1} parent=11 // pred_fallthru
          _
        // Predicated region
        $region21: #{tpu_custom_call.1} parent=11 // pred_check
          %p194 = pneg %p118
        $region22: #{tpu_custom_call.1} parent=11 // pred_check_branch
          %196 = sbr.rel (%p194) target = $region24
        $region23: #{tpu_custom_call.1} parent=11 // pred_region
          _
        $region24: #{tpu_custom_call.1} parent=11 // pred_fallthru
          _
        // Predicated region
        $region25: #{tpu_custom_call.1} parent=11 // pred_check
          %p197 = pneg %p139
        $region26: #{tpu_custom_call.1} parent=11 // pred_check_branch
          %199 = sbr.rel (%p197) target = $region28
        $region27: #{tpu_custom_call.1} parent=11 // pred_region
          %s201 = ssub.s32 16, 16
          %202 = vsyncadd [#allocation6], %s201
          %s204 = sshll.u32 [#allocation7], 4
          %s205 = int_to_ptr.vmem [resolvable:$true] %s204
          %207 = dma.hbm_to_vmem [thread:$0]  %s4, 16, %s205, [#allocation6]
        $region28: #{tpu_custom_call.1} parent=11 // pred_fallthru
          _
      $region12: #{tpu_custom_call.1} parent=5 // pred_fallthru
        _
      %p208 = scmp.lt.s32.totalorder %s15, 8
      // Predicated region
      $region29: #{tpu_custom_call.1} parent=5 // pred_check
        %p209 = pneg %p208
      $region30: #{tpu_custom_call.1} parent=5 // pred_check_branch
        %211 = sbr.rel (%p209) target = $region32
      $region31: #{tpu_custom_call.1} parent=5 // pred_region
        // Predicated region
        $region33: #{tpu_custom_call.1} parent=31 // pred_check
          %p212 = pneg %p49
        $region34: #{tpu_custom_call.1} parent=31 // pred_check_branch
          %214 = sbr.rel (%p212) target = $region36
        $region35: #{tpu_custom_call.1} parent=31 // pred_region
          #allocation9 [shape = 'u32[6]{0}', space=smem, size = 0x18, scoped, tag = 'DMA stride descriptor']
          %s215 = sand.u32 %s39, 1
          %s216 = scalar_lea.sflag [#allocation4], %s215
          %s217 = sand.u32 %s39, 1
          %s218 = smul.addr %s217, 1024
          %s219 = scalar_lea.vmem [#allocation3], %s218
          %s220 = smul.u32 8, %s22
          %s221 = smul.u32 8, %s23
          %s222 = ssub.s32 10, %s220
          %p223 = scmp.lt.s32.totalorder %s222, 8
          %s224 = scalar_select %p223, %s222, 8
          %s225 = smul.u32 128, %s224
          %s226 = ssub.s32 25, %s221
          %p227 = scmp.lt.s32.totalorder %s226, 8
          %s228 = scalar_select %p227, %s226, 8
          %s229 = smul.u32 %s225, %s228
          %s230 = smul.u32 %s229, 2
          %s232 = ssub.s32 16384, %s230
          %233 = vsyncadd %s216, %s232
          %p234 = scmp.ne.s32.totalorder 0, %s230
          %s235 = smul.addr %s221, 2
          %s236 = smul.addr %s220, 50
          %s237 = sadd.s32 %s235, %s236
          %s238 = smul.addr %s237, 128
          %s239 = scalar_lea.hbm %s0, %s238
          %s240 = smul.u32 16, %s228
          %s241 = smul.u32 %s240, %s224
          %s243 = sshll.u32 1, 14
          %s244 = sxor.u32 4294967295, %s243
          %s246 = sld [smem:[#allocation0]]
          %s247 = sadd.s32 2, %s246
          %s249 = sshll.u32 7, 26
          %s250 = sxor.u32 4294967295, %s249
          %s251 = sand.u32 0, %s250
          %s252 = sshll.u32 %s247, 26
          %s253 = sor.u32 %s251, %s252
          %s254 = sshll.u32 %s219, 4
          %s255 = int_to_ptr.vmem [resolvable:$true] %s254
          %s256 = sshll.u32 %s241, 4
          %261 = sst [smem:[#allocation9]] 6400
          %s262 = scalar_lea.smem [#allocation9], 1
          %263 = sst [smem:[%s262]] 2048
          %s264 = scalar_lea.smem [#allocation9], 2
          %265 = sst [smem:[%s264]] %s228
          %s266 = scalar_lea.smem [#allocation9], 3
          %267 = sst [smem:[%s266]] 256
          %s268 = scalar_lea.smem [#allocation9], 4
          %269 = sst [smem:[%s268]] 256
          %s270 = scalar_lea.smem [#allocation9], 5
          %271 = sst [smem:[%s270]] 16
          %273 = dma.general (%p234), %s239, %s256, %s255, %s216, 131072, [#allocation9], %s253, 0
        $region36: #{tpu_custom_call.1} parent=31 // pred_fallthru
          _
      $region32: #{tpu_custom_call.1} parent=5 // pred_fallthru
        _
      %p274 = scmp.le.s32.totalorder 1, %s15
      %p275 = scmp.lt.s32.totalorder %s15, 9
      %p276 = pnand %p274, %p275
      %p277 = pneg %p276
      // Predicated region
      $region37: #{tpu_custom_call.1} parent=5 // pred_check
        _
      $region38: #{tpu_custom_call.1} parent=5 // pred_check_branch
        %279 = sbr.rel (%p276) target = $region40
      $region39: #{tpu_custom_call.1} parent=5 // pred_region
        %s280 = ssub.s32 %s15, 1
        %s281 = sand.u32 %s42, 1
        %s282 = scalar_lea.sflag [#allocation4], %s281
        %s283 = sand.u32 %s42, 1
        %s284 = smul.addr %s283, 1024
        %s285 = scalar_lea.vmem [#allocation3], %s284
        // Predicated region
        $region41: #{tpu_custom_call.1} parent=39 // pred_check
          %p286 = pneg %p55
        $region42: #{tpu_custom_call.1} parent=39 // pred_check_branch
          %288 = sbr.rel (%p286) target = $region44
        $region43: #{tpu_custom_call.1} parent=39 // pred_region
          %289 = dma.done %s282, 16384
        $region44: #{tpu_custom_call.1} parent=39 // pred_fallthru
          _
        // Predicated region
        $region45: #{tpu_custom_call.1} parent=39 // pred_check
          %p290 = pneg %p97
        $region46: #{tpu_custom_call.1} parent=39 // pred_check_branch
          %292 = sbr.rel (%p290) target = $region48
        $region47: #{tpu_custom_call.1} parent=39 // pred_region
          %293 = dma.done [#allocation6], 16
        $region48: #{tpu_custom_call.1} parent=39 // pred_fallthru
          _
        // Predicated region
        $region49: #{tpu_custom_call.1} parent=39 // pred_check
          %p294 = pneg %p139
        $region50: #{tpu_custom_call.1} parent=39 // pred_check_branch
          %296 = sbr.rel (%p294) target = $region52
        $region51: #{tpu_custom_call.1} parent=39 // pred_region
          %297 = dma.done [#allocation6], 16
        $region52: #{tpu_custom_call.1} parent=39 // pred_fallthru
          _
        %s298 = sand.u32 %s42, 1
        %s299 = scalar_lea.sflag [#allocation4], %s298
        %s300 = sand.u32 %s42, 1
        %s301 = smul.addr %s300, 1024
        %s302 = scalar_lea.vmem [#allocation3], %s301
        %p303 = pneg %p55
        %p304 = pneg %p52
        %p305 = pneg %p76
        %p306 = pneg %p73
        %p307 = pneg %p97
        %p308 = pneg %p94
        %p309 = pneg %p118
        %p310 = pneg %p115
        %p311 = pneg %p139
        %p312 = pneg %p136
        %p313 = pneg %p165
        %p314 = pneg %p162
        %p315 = scmp.lt.s32.totalorder %s24, 1
        %s316 = scalar_select %p315, %s24, 1
        %s317 = smul.addr %s316, 8
        %s318 = scalar_lea.vmem %s5, %s317
        %s319 = smul.u32 8, %s24
        %s320 = smul.u32 8, %s25
        %s321 = ssub.s32 10, %s319
        %p322 = scmp.lt.s32.totalorder %s321, 8
        %s323 = scalar_select %p322, %s321, 8
        %s324 = smul.u32 128, %s323
        %s325 = ssub.s32 25, %s320
        %p326 = scmp.lt.s32.totalorder %s325, 8
        %s327 = scalar_select %p326, %s325, 8
        %s328 = smul.u32 %s324, %s327
        %s329 = smul.u32 %s328, 2
        %p330 = scmp.lt.s32.totalorder %s24, 1
        %s331 = scalar_select %p330, %s24, 1
        %s332 = smul.addr %s331, 8
        %s333 = scalar_lea.vmem %s5, %s332
        %p334 = scmp.eq.s32.totalorder %s25, 0
        // Predicated region
        $region53: #{tpu_custom_call.1} parent=39 // pred_check
          %p335 = pneg %p334
        $region54: #{tpu_custom_call.1} parent=39 // pred_check_branch
          %337 = sbr.rel (%p335) target = $region56
        $region55: #{tpu_custom_call.1} parent=39 // pred_region
          %338 = vst [vmem:[#allocation2] sm:$0xff] 0.0
          %339 = vst [vmem:[#allocation2 + $0x8] sm:$0xff] 0.0
        $region56: #{tpu_custom_call.1} parent=39 // pred_fallthru
          _
        %p340 = scmp.lt.s32.totalorder %s25, 3
        // Predicated region
        $region57: #{tpu_custom_call.1} parent=39 // pred_check
          %p341 = pneg %p340
        $region58: #{tpu_custom_call.1} parent=39 // pred_check_branch
          %343 = sbr.rel (%p341) target = $region60
        $region59: #{tpu_custom_call.1} parent=39 // pred_region
          %v344 = vld [vmem:[#allocation2] sm:$0xff]
          %v345 = vld [vmem:[#allocation2 + $0x8] sm:$0xff]
          %v346 = vld [vmem:[%s285] sm:$0xff]
          %v347 = vld [vmem:[%s285 + $0x8] sm:$0xff]
          %v348 = vld [vmem:[%s285 + $0x10] sm:$0xff]
          %v349 = vld [vmem:[%s285 + $0x18] sm:$0xff]
          %v350 = vld [vmem:[%s285 + $0x20] sm:$0xff]
          %v351 = vld [vmem:[%s285 + $0x28] sm:$0xff]
          %v352 = vld [vmem:[%s285 + $0x30] sm:$0xff]
          %v353 = vld [vmem:[%s285 + $0x38] sm:$0xff]
          %v354 = vld [vmem:[%s285 + $0x40] sm:$0xff]
          %v355 = vld [vmem:[%s285 + $0x48] sm:$0xff]
          %v356 = vld [vmem:[%s285 + $0x50] sm:$0xff]
          %v357 = vld [vmem:[%s285 + $0x58] sm:$0xff]
          %v358 = vld [vmem:[%s285 + $0x60] sm:$0xff]
          %v359 = vld [vmem:[%s285 + $0x68] sm:$0xff]
          %v360 = vld [vmem:[%s285 + $0x70] sm:$0xff]
          %v361 = vld [vmem:[%s285 + $0x78] sm:$0xff]
          %v362 = vld [vmem:[%s285 + $0x80] sm:$0xff]
          %v363 = vld [vmem:[%s285 + $0x88] sm:$0xff]
          %v364 = vld [vmem:[%s285 + $0x90] sm:$0xff]
          %v365 = vld [vmem:[%s285 + $0x98] sm:$0xff]
          %v366 = vld [vmem:[%s285 + $0xa0] sm:$0xff]
          %v367 = vld [vmem:[%s285 + $0xa8] sm:$0xff]
          %v368 = vld [vmem:[%s285 + $0xb0] sm:$0xff]
          %v369 = vld [vmem:[%s285 + $0xb8] sm:$0xff]
          %v370 = vld [vmem:[%s285 + $0xc0] sm:$0xff]
          %v371 = vld [vmem:[%s285 + $0xc8] sm:$0xff]
          %v372 = vld [vmem:[%s285 + $0xd0] sm:$0xff]
          %v373 = vld [vmem:[%s285 + $0xd8] sm:$0xff]
          %v374 = vld [vmem:[%s285 + $0xe0] sm:$0xff]
          %v375 = vld [vmem:[%s285 + $0xe8] sm:$0xff]
          %v376 = vld [vmem:[%s285 + $0xf0] sm:$0xff]
          %v377 = vld [vmem:[%s285 + $0xf8] sm:$0xff]
          %v378 = vld [vmem:[%s285 + $0x100] sm:$0xff]
          %v379 = vld [vmem:[%s285 + $0x108] sm:$0xff]
          %v380 = vld [vmem:[%s285 + $0x110] sm:$0xff]
          %v381 = vld [vmem:[%s285 + $0x118] sm:$0xff]
          %v382 = vld [vmem:[%s285 + $0x120] sm:$0xff]
          %v383 = vld [vmem:[%s285 + $0x128] sm:$0xff]
          %v384 = vld [vmem:[%s285 + $0x130] sm:$0xff]
          %v385 = vld [vmem:[%s285 + $0x138] sm:$0xff]
          %v386 = vld [vmem:[%s285 + $0x140] sm:$0xff]
          %v387 = vld [vmem:[%s285 + $0x148] sm:$0xff]
          %v388 = vld [vmem:[%s285 + $0x150] sm:$0xff]
          %v389 = vld [vmem:[%s285 + $0x158] sm:$0xff]
          %v390 = vld [vmem:[%s285 + $0x160] sm:$0xff]
          %v391 = vld [vmem:[%s285 + $0x168] sm:$0xff]
          %v392 = vld [vmem:[%s285 + $0x170] sm:$0xff]
          %v393 = vld [vmem:[%s285 + $0x178] sm:$0xff]
          %v394 = vld [vmem:[%s285 + $0x180] sm:$0xff]
          %v395 = vld [vmem:[%s285 + $0x188] sm:$0xff]
          %v396 = vld [vmem:[%s285 + $0x190] sm:$0xff]
          %v397 = vld [vmem:[%s285 + $0x198] sm:$0xff]
          %v398 = vld [vmem:[%s285 + $0x1a0] sm:$0xff]
          %v399 = vld [vmem:[%s285 + $0x1a8] sm:$0xff]
          %v400 = vld [vmem:[%s285 + $0x1b0] sm:$0xff]
          %v401 = vld [vmem:[%s285 + $0x1b8] sm:$0xff]
          %v402 = vld [vmem:[%s285 + $0x1c0] sm:$0xff]
          %v403 = vld [vmem:[%s285 + $0x1c8] sm:$0xff]
          %v404 = vld [vmem:[%s285 + $0x1d0] sm:$0xff]
          %v405 = vld [vmem:[%s285 + $0x1d8] sm:$0xff]
          %v406 = vld [vmem:[%s285 + $0x1e0] sm:$0xff]
          %v407 = vld [vmem:[%s285 + $0x1e8] sm:$0xff]
          %v408 = vld [vmem:[%s285 + $0x1f0] sm:$0xff]
          %v409 = vld [vmem:[%s285 + $0x1f8] sm:$0xff]
          %v410 = vld [vmem:[%s285 + $0x200] sm:$0xff]
          %v411 = vld [vmem:[%s285 + $0x208] sm:$0xff]
          %v412 = vld [vmem:[%s285 + $0x210] sm:$0xff]
          %v413 = vld [vmem:[%s285 + $0x218] sm:$0xff]
          %v414 = vld [vmem:[%s285 + $0x220] sm:$0xff]
          %v415 = vld [vmem:[%s285 + $0x228] sm:$0xff]
          %v416 = vld [vmem:[%s285 + $0x230] sm:$0xff]
          %v417 = vld [vmem:[%s285 + $0x238] sm:$0xff]
          %v418 = vld [vmem:[%s285 + $0x240] sm:$0xff]
          %v419 = vld [vmem:[%s285 + $0x248] sm:$0xff]
          %v420 = vld [vmem:[%s285 + $0x250] sm:$0xff]
          %v421 = vld [vmem:[%s285 + $0x258] sm:$0xff]
          %v422 = vld [vmem:[%s285 + $0x260] sm:$0xff]
          %v423 = vld [vmem:[%s285 + $0x268] sm:$0xff]
          %v424 = vld [vmem:[%s285 + $0x270] sm:$0xff]
          %v425 = vld [vmem:[%s285 + $0x278] sm:$0xff]
          %v426 = vld [vmem:[%s285 + $0x280] sm:$0xff]
          %v427 = vld [vmem:[%s285 + $0x288] sm:$0xff]
          %v428 = vld [vmem:[%s285 + $0x290] sm:$0xff]
          %v429 = vld [vmem:[%s285 + $0x298] sm:$0xff]
          %v430 = vld [vmem:[%s285 + $0x2a0] sm:$0xff]
          %v431 = vld [vmem:[%s285 + $0x2a8] sm:$0xff]
          %v432 = vld [vmem:[%s285 + $0x2b0] sm:$0xff]
          %v433 = vld [vmem:[%s285 + $0x2b8] sm:$0xff]
          %v434 = vld [vmem:[%s285 + $0x2c0] sm:$0xff]
          %v435 = vld [vmem:[%s285 + $0x2c8] sm:$0xff]
          %v436 = vld [vmem:[%s285 + $0x2d0] sm:$0xff]
          %v437 = vld [vmem:[%s285 + $0x2d8] sm:$0xff]
          %v438 = vld [vmem:[%s285 + $0x2e0] sm:$0xff]
          %v439 = vld [vmem:[%s285 + $0x2e8] sm:$0xff]
          %v440 = vld [vmem:[%s285 + $0x2f0] sm:$0xff]
          %v441 = vld [vmem:[%s285 + $0x2f8] sm:$0xff]
          %v442 = vld [vmem:[%s285 + $0x300] sm:$0xff]
          %v443 = vld [vmem:[%s285 + $0x308] sm:$0xff]
          %v444 = vld [vmem:[%s285 + $0x310] sm:$0xff]
          %v445 = vld [vmem:[%s285 + $0x318] sm:$0xff]
          %v446 = vld [vmem:[%s285 + $0x320] sm:$0xff]
          %v447 = vld [vmem:[%s285 + $0x328] sm:$0xff]
          %v448 = vld [vmem:[%s285 + $0x330] sm:$0xff]
          %v449 = vld [vmem:[%s285 + $0x338] sm:$0xff]
          %v450 = vld [vmem:[%s285 + $0x340] sm:$0xff]
          %v451 = vld [vmem:[%s285 + $0x348] sm:$0xff]
          %v452 = vld [vmem:[%s285 + $0x350] sm:$0xff]
          %v453 = vld [vmem:[%s285 + $0x358] sm:$0xff]
          %v454 = vld [vmem:[%s285 + $0x360] sm:$0xff]
          %v455 = vld [vmem:[%s285 + $0x368] sm:$0xff]
          %v456 = vld [vmem:[%s285 + $0x370] sm:$0xff]
          %v457 = vld [vmem:[%s285 + $0x378] sm:$0xff]
          %v458 = vld [vmem:[%s285 + $0x380] sm:$0xff]
          %v459 = vld [vmem:[%s285 + $0x388] sm:$0xff]
          %v460 = vld [vmem:[%s285 + $0x390] sm:$0xff]
          %v461 = vld [vmem:[%s285 + $0x398] sm:$0xff]
          %v462 = vld [vmem:[%s285 + $0x3a0] sm:$0xff]
          %v463 = vld [vmem:[%s285 + $0x3a8] sm:$0xff]
          %v464 = vld [vmem:[%s285 + $0x3b0] sm:$0xff]
          %v465 = vld [vmem:[%s285 + $0x3b8] sm:$0xff]
          %v466 = vld [vmem:[%s285 + $0x3c0] sm:$0xff]
          %v467 = vld [vmem:[%s285 + $0x3c8] sm:$0xff]
          %v468 = vld [vmem:[%s285 + $0x3d0] sm:$0xff]
          %v469 = vld [vmem:[%s285 + $0x3d8] sm:$0xff]
          %v470 = vld [vmem:[%s285 + $0x3e0] sm:$0xff]
          %v471 = vld [vmem:[%s285 + $0x3e8] sm:$0xff]
          %v472 = vld [vmem:[%s285 + $0x3f0] sm:$0xff]
          %v473 = vld [vmem:[%s285 + $0x3f8] sm:$0xff]
          %v474 = vadd.f32 %v346, %v348
          %v475 = vadd.f32 %v474, %v350
          %v476 = vadd.f32 %v475, %v352
          %v477 = vadd.f32 %v476, %v354
          %v478 = vadd.f32 %v477, %v356
          %v479 = vadd.f32 %v478, %v358
          %v480 = vadd.f32 %v479, %v360
          %v481 = vrot.slane %v480, 4
          %v482 = vadd.f32 %v480, %v481
          %v483 = vrot.slane %v482, 2
          %v484 = vadd.f32 %v482, %v483
          %v485 = vrot.slane %v484, 1
          %v486 = vadd.f32 %v484, %v485
          %v487 = vadd.f32 %v347, %v349
          %v488 = vadd.f32 %v487, %v351
          %v489 = vadd.f32 %v488, %v353
          %v490 = vadd.f32 %v489, %v355
          %v491 = vadd.f32 %v490, %v357
          %v492 = vadd.f32 %v491, %v359
          %v493 = vadd.f32 %v492, %v361
          %v494 = vrot.slane %v493, 4
          %v495 = vadd.f32 %v493, %v494
          %v496 = vrot.slane %v495, 2
          %v497 = vadd.f32 %v495, %v496
          %v498 = vrot.slane %v497, 1
          %v499 = vadd.f32 %v497, %v498
          %v500 = vadd.f32 %v362, %v364
          %v501 = vadd.f32 %v500, %v366
          %v502 = vadd.f32 %v501, %v368
          %v503 = vadd.f32 %v502, %v370
          %v504 = vadd.f32 %v503, %v372
          %v505 = vadd.f32 %v504, %v374
          %v506 = vadd.f32 %v505, %v376
          %v507 = vrot.slane %v506, 4
          %v508 = vadd.f32 %v506, %v507
          %v509 = vrot.slane %v508, 2
          %v510 = vadd.f32 %v508, %v509
          %v511 = vrot.slane %v510, 1
          %v512 = vadd.f32 %v510, %v511
          %v513 = vadd.f32 %v363, %v365
          %v514 = vadd.f32 %v513, %v367
          %v515 = vadd.f32 %v514, %v369
          %v516 = vadd.f32 %v515, %v371
          %v517 = vadd.f32 %v516, %v373
          %v518 = vadd.f32 %v517, %v375
          %v519 = vadd.f32 %v518, %v377
          %v520 = vrot.slane %v519, 4
          %v521 = vadd.f32 %v519, %v520
          %v522 = vrot.slane %v521, 2
          %v523 = vadd.f32 %v521, %v522
          %v524 = vrot.slane %v523, 1
          %v525 = vadd.f32 %v523, %v524
          %v526 = vadd.f32 %v378, %v380
          %v527 = vadd.f32 %v526, %v382
          %v528 = vadd.f32 %v527, %v384
          %v529 = vadd.f32 %v528, %v386
          %v530 = vadd.f32 %v529, %v388
          %v531 = vadd.f32 %v530, %v390
          %v532 = vadd.f32 %v531, %v392
          %v533 = vrot.slane %v532, 4
          %v534 = vadd.f32 %v532, %v533
          %v535 = vrot.slane %v534, 2
          %v536 = vadd.f32 %v534, %v535
          %v537 = vrot.slane %v536, 1
          %v538 = vadd.f32 %v536, %v537
          %v539 = vadd.f32 %v379, %v381
          %v540 = vadd.f32 %v539, %v383
          %v541 = vadd.f32 %v540, %v385
          %v542 = vadd.f32 %v541, %v387
          %v543 = vadd.f32 %v542, %v389
          %v544 = vadd.f32 %v543, %v391
          %v545 = vadd.f32 %v544, %v393
          %v546 = vrot.slane %v545, 4
          %v547 = vadd.f32 %v545, %v546
          %v548 = vrot.slane %v547, 2
          %v549 = vadd.f32 %v547, %v548
          %v550 = vrot.slane %v549, 1
          %v551 = vadd.f32 %v549, %v550
          %v552 = vadd.f32 %v394, %v396
          %v553 = vadd.f32 %v552, %v398
          %v554 = vadd.f32 %v553, %v400
          %v555 = vadd.f32 %v554, %v402
          %v556 = vadd.f32 %v555, %v404
          %v557 = vadd.f32 %v556, %v406
          %v558 = vadd.f32 %v557, %v408
          %v559 = vrot.slane %v558, 4
          %v560 = vadd.f32 %v558, %v559
          %v561 = vrot.slane %v560, 2
          %v562 = vadd.f32 %v560, %v561
          %v563 = vrot.slane %v562, 1
          %v564 = vadd.f32 %v562, %v563
          %v565 = vadd.f32 %v395, %v397
          %v566 = vadd.f32 %v565, %v399
          %v567 = vadd.f32 %v566, %v401
          %v568 = vadd.f32 %v567, %v403
          %v569 = vadd.f32 %v568, %v405
          %v570 = vadd.f32 %v569, %v407
          %v571 = vadd.f32 %v570, %v409
          %v572 = vrot.slane %v571, 4
          %v573 = vadd.f32 %v571, %v572
          %v574 = vrot.slane %v573, 2
          %v575 = vadd.f32 %v573, %v574
          %v576 = vrot.slane %v575, 1
          %v577 = vadd.f32 %v575, %v576
          %v578 = vadd.f32 %v410, %v412
          %v579 = vadd.f32 %v578, %v414
          %v580 = vadd.f32 %v579, %v416
          %v581 = vadd.f32 %v580, %v418
          %v582 = vadd.f32 %v581, %v420
          %v583 = vadd.f32 %v582, %v422
          %v584 = vadd.f32 %v583, %v424
          %v585 = vrot.slane %v584, 4
          %v586 = vadd.f32 %v584, %v585
          %v587 = vrot.slane %v586, 2
          %v588 = vadd.f32 %v586, %v587
          %v589 = vrot.slane %v588, 1
          %v590 = vadd.f32 %v588, %v589
          %v591 = vadd.f32 %v411, %v413
          %v592 = vadd.f32 %v591, %v415
          %v593 = vadd.f32 %v592, %v417
          %v594 = vadd.f32 %v593, %v419
          %v595 = vadd.f32 %v594, %v421
          %v596 = vadd.f32 %v595, %v423
          %v597 = vadd.f32 %v596, %v425
          %v598 = vrot.slane %v597, 4
          %v599 = vadd.f32 %v597, %v598
          %v600 = vrot.slane %v599, 2
          %v601 = vadd.f32 %v599, %v600
          %v602 = vrot.slane %v601, 1
          %v603 = vadd.f32 %v601, %v602
          %v604 = vadd.f32 %v426, %v428
          %v605 = vadd.f32 %v604, %v430
          %v606 = vadd.f32 %v605, %v432
          %v607 = vadd.f32 %v606, %v434
          %v608 = vadd.f32 %v607, %v436
          %v609 = vadd.f32 %v608, %v438
          %v610 = vadd.f32 %v609, %v440
          %v611 = vrot.slane %v610, 4
          %v612 = vadd.f32 %v610, %v611
          %v613 = vrot.slane %v612, 2
          %v614 = vadd.f32 %v612, %v613
          %v615 = vrot.slane %v614, 1
          %v616 = vadd.f32 %v614, %v615
          %v617 = vadd.f32 %v427, %v429
          %v618 = vadd.f32 %v617, %v431
          %v619 = vadd.f32 %v618, %v433
          %v620 = vadd.f32 %v619, %v435
          %v621 = vadd.f32 %v620, %v437
          %v622 = vadd.f32 %v621, %v439
          %v623 = vadd.f32 %v622, %v441
          %v624 = vrot.slane %v623, 4
          %v625 = vadd.f32 %v623, %v624
          %v626 = vrot.slane %v625, 2
          %v627 = vadd.f32 %v625, %v626
          %v628 = vrot.slane %v627, 1
          %v629 = vadd.f32 %v627, %v628
          %v630 = vadd.f32 %v442, %v444
          %v631 = vadd.f32 %v630, %v446
          %v632 = vadd.f32 %v631, %v448
          %v633 = vadd.f32 %v632, %v450
          %v634 = vadd.f32 %v633, %v452
          %v635 = vadd.f32 %v634, %v454
          %v636 = vadd.f32 %v635, %v456
          %v637 = vrot.slane %v636, 4
          %v638 = vadd.f32 %v636, %v637
          %v639 = vrot.slane %v638, 2
          %v640 = vadd.f32 %v638, %v639
          %v641 = vrot.slane %v640, 1
          %v642 = vadd.f32 %v640, %v641
          %v643 = vadd.f32 %v443, %v445
          %v644 = vadd.f32 %v643, %v447
          %v645 = vadd.f32 %v644, %v449
          %v646 = vadd.f32 %v645, %v451
          %v647 = vadd.f32 %v646, %v453
          %v648 = vadd.f32 %v647, %v455
          %v649 = vadd.f32 %v648, %v457
          %v650 = vrot.slane %v649, 4
          %v651 = vadd.f32 %v649, %v650
          %v652 = vrot.slane %v651, 2
          %v653 = vadd.f32 %v651, %v652
          %v654 = vrot.slane %v653, 1
          %v655 = vadd.f32 %v653, %v654
          %v656 = vadd.f32 %v458, %v460
          %v657 = vadd.f32 %v656, %v462
          %v658 = vadd.f32 %v657, %v464
          %v659 = vadd.f32 %v658, %v466
          %v660 = vadd.f32 %v659, %v468
          %v661 = vadd.f32 %v660, %v470
          %v662 = vadd.f32 %v661, %v472
          %v663 = vrot.slane %v662, 4
          %v664 = vadd.f32 %v662, %v663
          %v665 = vrot.slane %v664, 2
          %v666 = vadd.f32 %v664, %v665
          %v667 = vrot.slane %v666, 1
          %v668 = vadd.f32 %v666, %v667
          %v669 = vadd.f32 %v459, %v461
          %v670 = vadd.f32 %v669, %v463
          %v671 = vadd.f32 %v670, %v465
          %v672 = vadd.f32 %v671, %v467
          %v673 = vadd.f32 %v672, %v469
          %v674 = vadd.f32 %v673, %v471
          %v675 = vadd.f32 %v674, %v473
          %v676 = vrot.slane %v675, 4
          %v677 = vadd.f32 %v675, %v676
          %v678 = vrot.slane %v677, 2
          %v679 = vadd.f32 %v677, %v678
          %v680 = vrot.slane %v679, 1
          %v681 = vadd.f32 %v679, %v680
          %vm698 = vcmask 1041409
          %v699 = vsel %vm698, %v512, %v486
          %vm700 = vcmask 1042434
          %v701 = vsel %vm700, %v538, %v699
          %vm702 = vcmask 1043459
          %v703 = vsel %vm702, %v564, %v701
          %vm704 = vcmask 1044484
          %v705 = vsel %vm704, %v590, %v703
          %vm706 = vcmask 1045509
          %v707 = vsel %vm706, %v616, %v705
          %vm708 = vcmask 1046534
          %v709 = vsel %vm708, %v642, %v707
          %vm710 = vcmask 1047559
          %v711 = vsel %vm710, %v668, %v709
          %v712 = vsel %vm698, %v525, %v499
          %v713 = vsel %vm700, %v551, %v712
          %v714 = vsel %vm702, %v577, %v713
          %v715 = vsel %vm704, %v603, %v714
          %v716 = vsel %vm706, %v629, %v715
          %v717 = vsel %vm708, %v655, %v716
          %v718 = vsel %vm710, %v681, %v717
          %v721 = vadd.f32 %v344, %v711
          %v722 = vadd.f32 %v345, %v718
          %723 = vst [vmem:[#allocation2] sm:$0xff] %v721
          %724 = vst [vmem:[#allocation2 + $0x8] sm:$0xff] %v722
        $region60: #{tpu_custom_call.1} parent=39 // pred_fallthru
          _
        %p725 = scmp.eq.s32.totalorder %s25, 3
        // Predicated region
        $region61: #{tpu_custom_call.1} parent=39 // pred_check
          %p726 = pneg %p725
        $region62: #{tpu_custom_call.1} parent=39 // pred_check_branch
          %728 = sbr.rel (%p726) target = $region64
        $region63: #{tpu_custom_call.1} parent=39 // pred_region
          %v729 = vld [vmem:[%s285] sm:$0xff]
          %v730 = vld [vmem:[%s285 + $0x8] sm:$0xff]
          %v731 = vld [vmem:[%s285 + $0x10] sm:$0xff]
          %v732 = vld [vmem:[%s285 + $0x18] sm:$0xff]
          %v733 = vld [vmem:[%s285 + $0x20] sm:$0xff]
          %v734 = vld [vmem:[%s285 + $0x28] sm:$0xff]
          %v735 = vld [vmem:[%s285 + $0x30] sm:$0xff]
          %v736 = vld [vmem:[%s285 + $0x38] sm:$0xff]
          %v737 = vld [vmem:[%s285 + $0x40] sm:$0xff]
          %v738 = vld [vmem:[%s285 + $0x48] sm:$0xff]
          %v739 = vld [vmem:[%s285 + $0x50] sm:$0xff]
          %v740 = vld [vmem:[%s285 + $0x58] sm:$0xff]
          %v741 = vld [vmem:[%s285 + $0x60] sm:$0xff]
          %v742 = vld [vmem:[%s285 + $0x68] sm:$0xff]
          %v743 = vld [vmem:[%s285 + $0x70] sm:$0xff]
          %v744 = vld [vmem:[%s285 + $0x78] sm:$0xff]
          %v745 = vld [vmem:[%s285 + $0x80] sm:$0xff]
          %v746 = vld [vmem:[%s285 + $0x88] sm:$0xff]
          %v747 = vld [vmem:[%s285 + $0x90] sm:$0xff]
          %v748 = vld [vmem:[%s285 + $0x98] sm:$0xff]
          %v749 = vld [vmem:[%s285 + $0xa0] sm:$0xff]
          %v750 = vld [vmem:[%s285 + $0xa8] sm:$0xff]
          %v751 = vld [vmem:[%s285 + $0xb0] sm:$0xff]
          %v752 = vld [vmem:[%s285 + $0xb8] sm:$0xff]
          %v753 = vld [vmem:[%s285 + $0xc0] sm:$0xff]
          %v754 = vld [vmem:[%s285 + $0xc8] sm:$0xff]
          %v755 = vld [vmem:[%s285 + $0xd0] sm:$0xff]
          %v756 = vld [vmem:[%s285 + $0xd8] sm:$0xff]
          %v757 = vld [vmem:[%s285 + $0xe0] sm:$0xff]
          %v758 = vld [vmem:[%s285 + $0xe8] sm:$0xff]
          %v759 = vld [vmem:[%s285 + $0xf0] sm:$0xff]
          %v760 = vld [vmem:[%s285 + $0xf8] sm:$0xff]
          %v761 = vld [vmem:[%s285 + $0x100] sm:$0xff]
          %v762 = vld [vmem:[%s285 + $0x108] sm:$0xff]
          %v763 = vld [vmem:[%s285 + $0x110] sm:$0xff]
          %v764 = vld [vmem:[%s285 + $0x118] sm:$0xff]
          %v765 = vld [vmem:[%s285 + $0x120] sm:$0xff]
          %v766 = vld [vmem:[%s285 + $0x128] sm:$0xff]
          %v767 = vld [vmem:[%s285 + $0x130] sm:$0xff]
          %v768 = vld [vmem:[%s285 + $0x138] sm:$0xff]
          %v769 = vld [vmem:[%s285 + $0x140] sm:$0xff]
          %v770 = vld [vmem:[%s285 + $0x148] sm:$0xff]
          %v771 = vld [vmem:[%s285 + $0x150] sm:$0xff]
          %v772 = vld [vmem:[%s285 + $0x158] sm:$0xff]
          %v773 = vld [vmem:[%s285 + $0x160] sm:$0xff]
          %v774 = vld [vmem:[%s285 + $0x168] sm:$0xff]
          %v775 = vld [vmem:[%s285 + $0x170] sm:$0xff]
          %v776 = vld [vmem:[%s285 + $0x178] sm:$0xff]
          %v777 = vld [vmem:[%s285 + $0x180] sm:$0xff]
          %v778 = vld [vmem:[%s285 + $0x188] sm:$0xff]
          %v779 = vld [vmem:[%s285 + $0x190] sm:$0xff]
          %v780 = vld [vmem:[%s285 + $0x198] sm:$0xff]
          %v781 = vld [vmem:[%s285 + $0x1a0] sm:$0xff]
          %v782 = vld [vmem:[%s285 + $0x1a8] sm:$0xff]
          %v783 = vld [vmem:[%s285 + $0x1b0] sm:$0xff]
          %v784 = vld [vmem:[%s285 + $0x1b8] sm:$0xff]
          %v785 = vld [vmem:[%s285 + $0x1c0] sm:$0xff]
          %v786 = vld [vmem:[%s285 + $0x1c8] sm:$0xff]
          %v787 = vld [vmem:[%s285 + $0x1d0] sm:$0xff]
          %v788 = vld [vmem:[%s285 + $0x1d8] sm:$0xff]
          %v789 = vld [vmem:[%s285 + $0x1e0] sm:$0xff]
          %v790 = vld [vmem:[%s285 + $0x1e8] sm:$0xff]
          %v791 = vld [vmem:[%s285 + $0x1f0] sm:$0xff]
          %v792 = vld [vmem:[%s285 + $0x1f8] sm:$0xff]
          %v793 = vld [vmem:[%s285 + $0x200] sm:$0xff]
          %v794 = vld [vmem:[%s285 + $0x208] sm:$0xff]
          %v795 = vld [vmem:[%s285 + $0x210] sm:$0xff]
          %v796 = vld [vmem:[%s285 + $0x218] sm:$0xff]
          %v797 = vld [vmem:[%s285 + $0x220] sm:$0xff]
          %v798 = vld [vmem:[%s285 + $0x228] sm:$0xff]
          %v799 = vld [vmem:[%s285 + $0x230] sm:$0xff]
          %v800 = vld [vmem:[%s285 + $0x238] sm:$0xff]
          %v801 = vld [vmem:[%s285 + $0x240] sm:$0xff]
          %v802 = vld [vmem:[%s285 + $0x248] sm:$0xff]
          %v803 = vld [vmem:[%s285 + $0x250] sm:$0xff]
          %v804 = vld [vmem:[%s285 + $0x258] sm:$0xff]
          %v805 = vld [vmem:[%s285 + $0x260] sm:$0xff]
          %v806 = vld [vmem:[%s285 + $0x268] sm:$0xff]
          %v807 = vld [vmem:[%s285 + $0x270] sm:$0xff]
          %v808 = vld [vmem:[%s285 + $0x278] sm:$0xff]
          %v809 = vld [vmem:[%s285 + $0x280] sm:$0xff]
          %v810 = vld [vmem:[%s285 + $0x288] sm:$0xff]
          %v811 = vld [vmem:[%s285 + $0x290] sm:$0xff]
          %v812 = vld [vmem:[%s285 + $0x298] sm:$0xff]
          %v813 = vld [vmem:[%s285 + $0x2a0] sm:$0xff]
          %v814 = vld [vmem:[%s285 + $0x2a8] sm:$0xff]
          %v815 = vld [vmem:[%s285 + $0x2b0] sm:$0xff]
          %v816 = vld [vmem:[%s285 + $0x2b8] sm:$0xff]
          %v817 = vld [vmem:[%s285 + $0x2c0] sm:$0xff]
          %v818 = vld [vmem:[%s285 + $0x2c8] sm:$0xff]
          %v819 = vld [vmem:[%s285 + $0x2d0] sm:$0xff]
          %v820 = vld [vmem:[%s285 + $0x2d8] sm:$0xff]
          %v821 = vld [vmem:[%s285 + $0x2e0] sm:$0xff]
          %v822 = vld [vmem:[%s285 + $0x2e8] sm:$0xff]
          %v823 = vld [vmem:[%s285 + $0x2f0] sm:$0xff]
          %v824 = vld [vmem:[%s285 + $0x2f8] sm:$0xff]
          %v825 = vld [vmem:[%s285 + $0x300] sm:$0xff]
          %v826 = vld [vmem:[%s285 + $0x308] sm:$0xff]
          %v827 = vld [vmem:[%s285 + $0x310] sm:$0xff]
          %v828 = vld [vmem:[%s285 + $0x318] sm:$0xff]
          %v829 = vld [vmem:[%s285 + $0x320] sm:$0xff]
          %v830 = vld [vmem:[%s285 + $0x328] sm:$0xff]
          %v831 = vld [vmem:[%s285 + $0x330] sm:$0xff]
          %v832 = vld [vmem:[%s285 + $0x338] sm:$0xff]
          %v833 = vld [vmem:[%s285 + $0x340] sm:$0xff]
          %v834 = vld [vmem:[%s285 + $0x348] sm:$0xff]
          %v835 = vld [vmem:[%s285 + $0x350] sm:$0xff]
          %v836 = vld [vmem:[%s285 + $0x358] sm:$0xff]
          %v837 = vld [vmem:[%s285 + $0x360] sm:$0xff]
          %v838 = vld [vmem:[%s285 + $0x368] sm:$0xff]
          %v839 = vld [vmem:[%s285 + $0x370] sm:$0xff]
          %v840 = vld [vmem:[%s285 + $0x378] sm:$0xff]
          %v841 = vld [vmem:[%s285 + $0x380] sm:$0xff]
          %v842 = vld [vmem:[%s285 + $0x388] sm:$0xff]
          %v843 = vld [vmem:[%s285 + $0x390] sm:$0xff]
          %v844 = vld [vmem:[%s285 + $0x398] sm:$0xff]
          %v845 = vld [vmem:[%s285 + $0x3a0] sm:$0xff]
          %v846 = vld [vmem:[%s285 + $0x3a8] sm:$0xff]
          %v847 = vld [vmem:[%s285 + $0x3b0] sm:$0xff]
          %v848 = vld [vmem:[%s285 + $0x3b8] sm:$0xff]
          %v849 = vld [vmem:[%s285 + $0x3c0] sm:$0xff]
          %v850 = vld [vmem:[%s285 + $0x3c8] sm:$0xff]
          %v851 = vld [vmem:[%s285 + $0x3d0] sm:$0xff]
          %v852 = vld [vmem:[%s285 + $0x3d8] sm:$0xff]
          %v853 = vld [vmem:[%s285 + $0x3e0] sm:$0xff]
          %v854 = vld [vmem:[%s285 + $0x3e8] sm:$0xff]
          %v855 = vld [vmem:[%s285 + $0x3f0] sm:$0xff]
          %v856 = vld [vmem:[%s285 + $0x3f8] sm:$0xff]
          %v857 = vlaneseq
          %v858 = vshrl.u32 %v857, 7
          %v859 = vadd.s32 %v858, 8
          %v860 = vadd.s32 %v858, 16
          %v861 = vadd.s32 %v858, 24
          %v862 = vadd.s32 %v858, 32
          %v863 = vadd.s32 %v858, 40
          %v864 = vadd.s32 %v858, 48
          %v865 = vadd.s32 %v858, 56
          %vm866 = vcmp.lt.s32.totalorder %v858, 8
          %vm867 = vcmp.lt.s32.totalorder %v859, 8
          %vm868 = vcmp.lt.s32.totalorder %v860, 8
          %vm869 = vcmp.lt.s32.totalorder %v861, 8
          %vm870 = vcmp.lt.s32.totalorder %v862, 8
          %vm871 = vcmp.lt.s32.totalorder %v863, 8
          %vm872 = vcmp.lt.s32.totalorder %v864, 8
          %vm873 = vcmp.lt.s32.totalorder %v865, 8
          %v874 = vsel %vm866, %v729, 0.0
          %v875 = vsel %vm866, %v730, 0.0
          %v876 = vsel %vm867, %v731, 0.0
          %v877 = vsel %vm867, %v732, 0.0
          %v878 = vsel %vm868, %v733, 0.0
          %v879 = vsel %vm868, %v734, 0.0
          %v880 = vsel %vm869, %v735, 0.0
          %v881 = vsel %vm869, %v736, 0.0
          %v882 = vsel %vm870, %v737, 0.0
          %v883 = vsel %vm870, %v738, 0.0
          %v884 = vsel %vm871, %v739, 0.0
          %v885 = vsel %vm871, %v740, 0.0
          %v886 = vsel %vm872, %v741, 0.0
          %v887 = vsel %vm872, %v742, 0.0
          %v888 = vsel %vm873, %v743, 0.0
          %v889 = vsel %vm873, %v744, 0.0
          %v890 = vsel %vm866, %v745, 0.0
          %v891 = vsel %vm866, %v746, 0.0
          %v892 = vsel %vm867, %v747, 0.0
          %v893 = vsel %vm867, %v748, 0.0
          %v894 = vsel %vm868, %v749, 0.0
          %v895 = vsel %vm868, %v750, 0.0
          %v896 = vsel %vm869, %v751, 0.0
          %v897 = vsel %vm869, %v752, 0.0
          %v898 = vsel %vm870, %v753, 0.0
          %v899 = vsel %vm870, %v754, 0.0
          %v900 = vsel %vm871, %v755, 0.0
          %v901 = vsel %vm871, %v756, 0.0
          %v902 = vsel %vm872, %v757, 0.0
          %v903 = vsel %vm872, %v758, 0.0
          %v904 = vsel %vm873, %v759, 0.0
          %v905 = vsel %vm873, %v760, 0.0
          %v906 = vsel %vm866, %v761, 0.0
          %v907 = vsel %vm866, %v762, 0.0
          %v908 = vsel %vm867, %v763, 0.0
          %v909 = vsel %vm867, %v764, 0.0
          %v910 = vsel %vm868, %v765, 0.0
          %v911 = vsel %vm868, %v766, 0.0
          %v912 = vsel %vm869, %v767, 0.0
          %v913 = vsel %vm869, %v768, 0.0
          %v914 = vsel %vm870, %v769, 0.0
          %v915 = vsel %vm870, %v770, 0.0
          %v916 = vsel %vm871, %v771, 0.0
          %v917 = vsel %vm871, %v772, 0.0
          %v918 = vsel %vm872, %v773, 0.0
          %v919 = vsel %vm872, %v774, 0.0
          %v920 = vsel %vm873, %v775, 0.0
          %v921 = vsel %vm873, %v776, 0.0
          %v922 = vsel %vm866, %v777, 0.0
          %v923 = vsel %vm866, %v778, 0.0
          %v924 = vsel %vm867, %v779, 0.0
          %v925 = vsel %vm867, %v780, 0.0
          %v926 = vsel %vm868, %v781, 0.0
          %v927 = vsel %vm868, %v782, 0.0
          %v928 = vsel %vm869, %v783, 0.0
          %v929 = vsel %vm869, %v784, 0.0
          %v930 = vsel %vm870, %v785, 0.0
          %v931 = vsel %vm870, %v786, 0.0
          %v932 = vsel %vm871, %v787, 0.0
          %v933 = vsel %vm871, %v788, 0.0
          %v934 = vsel %vm872, %v789, 0.0
          %v935 = vsel %vm872, %v790, 0.0
          %v936 = vsel %vm873, %v791, 0.0
          %v937 = vsel %vm873, %v792, 0.0
          %v938 = vsel %vm866, %v793, 0.0
          %v939 = vsel %vm866, %v794, 0.0
          %v940 = vsel %vm867, %v795, 0.0
          %v941 = vsel %vm867, %v796, 0.0
          %v942 = vsel %vm868, %v797, 0.0
          %v943 = vsel %vm868, %v798, 0.0
          %v944 = vsel %vm869, %v799, 0.0
          %v945 = vsel %vm869, %v800, 0.0
          %v946 = vsel %vm870, %v801, 0.0
          %v947 = vsel %vm870, %v802, 0.0
          %v948 = vsel %vm871, %v803, 0.0
          %v949 = vsel %vm871, %v804, 0.0
          %v950 = vsel %vm872, %v805, 0.0
          %v951 = vsel %vm872, %v806, 0.0
          %v952 = vsel %vm873, %v807, 0.0
          %v953 = vsel %vm873, %v808, 0.0
          %v954 = vsel %vm866, %v809, 0.0
          %v955 = vsel %vm866, %v810, 0.0
          %v956 = vsel %vm867, %v811, 0.0
          %v957 = vsel %vm867, %v812, 0.0
          %v958 = vsel %vm868, %v813, 0.0
          %v959 = vsel %vm868, %v814, 0.0
          %v960 = vsel %vm869, %v815, 0.0
          %v961 = vsel %vm869, %v816, 0.0
          %v962 = vsel %vm870, %v817, 0.0
          %v963 = vsel %vm870, %v818, 0.0
          %v964 = vsel %vm871, %v819, 0.0
          %v965 = vsel %vm871, %v820, 0.0
          %v966 = vsel %vm872, %v821, 0.0
          %v967 = vsel %vm872, %v822, 0.0
          %v968 = vsel %vm873, %v823, 0.0
          %v969 = vsel %vm873, %v824, 0.0
          %v970 = vsel %vm866, %v825, 0.0
          %v971 = vsel %vm866, %v826, 0.0
          %v972 = vsel %vm867, %v827, 0.0
          %v973 = vsel %vm867, %v828, 0.0
          %v974 = vsel %vm868, %v829, 0.0
          %v975 = vsel %vm868, %v830, 0.0
          %v976 = vsel %vm869, %v831, 0.0
          %v977 = vsel %vm869, %v832, 0.0
          %v978 = vsel %vm870, %v833, 0.0
          %v979 = vsel %vm870, %v834, 0.0
          %v980 = vsel %vm871, %v835, 0.0
          %v981 = vsel %vm871, %v836, 0.0
          %v982 = vsel %vm872, %v837, 0.0
          %v983 = vsel %vm872, %v838, 0.0
          %v984 = vsel %vm873, %v839, 0.0
          %v985 = vsel %vm873, %v840, 0.0
          %v986 = vsel %vm866, %v841, 0.0
          %v987 = vsel %vm866, %v842, 0.0
          %v988 = vsel %vm867, %v843, 0.0
          %v989 = vsel %vm867, %v844, 0.0
          %v990 = vsel %vm868, %v845, 0.0
          %v991 = vsel %vm868, %v846, 0.0
          %v992 = vsel %vm869, %v847, 0.0
          %v993 = vsel %vm869, %v848, 0.0
          %v994 = vsel %vm870, %v849, 0.0
          %v995 = vsel %vm870, %v850, 0.0
          %v996 = vsel %vm871, %v851, 0.0
          %v997 = vsel %vm871, %v852, 0.0
          %v998 = vsel %vm872, %v853, 0.0
          %v999 = vsel %vm872, %v854, 0.0
          %v1000 = vsel %vm873, %v855, 0.0
          %v1001 = vsel %vm873, %v856, 0.0
          %v1002 = vld [vmem:[#allocation2] sm:$0xff]
          %v1003 = vld [vmem:[#allocation2 + $0x8] sm:$0xff]
          %v1004 = vadd.f32 %v874, %v876
          %v1005 = vadd.f32 %v1004, %v878
          %v1006 = vadd.f32 %v1005, %v880
          %v1007 = vadd.f32 %v1006, %v882
          %v1008 = vadd.f32 %v1007, %v884
          %v1009 = vadd.f32 %v1008, %v886
          %v1010 = vadd.f32 %v1009, %v888
          %v1011 = vrot.slane %v1010, 4
          %v1012 = vadd.f32 %v1010, %v1011
          %v1013 = vrot.slane %v1012, 2
          %v1014 = vadd.f32 %v1012, %v1013
          %v1015 = vrot.slane %v1014, 1
          %v1016 = vadd.f32 %v1014, %v1015
          %v1017 = vadd.f32 %v875, %v877
          %v1018 = vadd.f32 %v1017, %v879
          %v1019 = vadd.f32 %v1018, %v881
          %v1020 = vadd.f32 %v1019, %v883
          %v1021 = vadd.f32 %v1020, %v885
          %v1022 = vadd.f32 %v1021, %v887
          %v1023 = vadd.f32 %v1022, %v889
          %v1024 = vrot.slane %v1023, 4
          %v1025 = vadd.f32 %v1023, %v1024
          %v1026 = vrot.slane %v1025, 2
          %v1027 = vadd.f32 %v1025, %v1026
          %v1028 = vrot.slane %v1027, 1
          %v1029 = vadd.f32 %v1027, %v1028
          %v1030 = vadd.f32 %v890, %v892
          %v1031 = vadd.f32 %v1030, %v894
          %v1032 = vadd.f32 %v1031, %v896
          %v1033 = vadd.f32 %v1032, %v898
          %v1034 = vadd.f32 %v1033, %v900
          %v1035 = vadd.f32 %v1034, %v902
          %v1036 = vadd.f32 %v1035, %v904
          %v1037 = vrot.slane %v1036, 4
          %v1038 = vadd.f32 %v1036, %v1037
          %v1039 = vrot.slane %v1038, 2
          %v1040 = vadd.f32 %v1038, %v1039
          %v1041 = vrot.slane %v1040, 1
          %v1042 = vadd.f32 %v1040, %v1041
          %v1043 = vadd.f32 %v891, %v893
          %v1044 = vadd.f32 %v1043, %v895
          %v1045 = vadd.f32 %v1044, %v897
          %v1046 = vadd.f32 %v1045, %v899
          %v1047 = vadd.f32 %v1046, %v901
          %v1048 = vadd.f32 %v1047, %v903
          %v1049 = vadd.f32 %v1048, %v905
          %v1050 = vrot.slane %v1049, 4
          %v1051 = vadd.f32 %v1049, %v1050
          %v1052 = vrot.slane %v1051, 2
          %v1053 = vadd.f32 %v1051, %v1052
          %v1054 = vrot.slane %v1053, 1
          %v1055 = vadd.f32 %v1053, %v1054
          %v1056 = vadd.f32 %v906, %v908
          %v1057 = vadd.f32 %v1056, %v910
          %v1058 = vadd.f32 %v1057, %v912
          %v1059 = vadd.f32 %v1058, %v914
          %v1060 = vadd.f32 %v1059, %v916
          %v1061 = vadd.f32 %v1060, %v918
          %v1062 = vadd.f32 %v1061, %v920
          %v1063 = vrot.slane %v1062, 4
          %v1064 = vadd.f32 %v1062, %v1063
          %v1065 = vrot.slane %v1064, 2
          %v1066 = vadd.f32 %v1064, %v1065
          %v1067 = vrot.slane %v1066, 1
          %v1068 = vadd.f32 %v1066, %v1067
          %v1069 = vadd.f32 %v907, %v909
          %v1070 = vadd.f32 %v1069, %v911
          %v1071 = vadd.f32 %v1070, %v913
          %v1072 = vadd.f32 %v1071, %v915
          %v1073 = vadd.f32 %v1072, %v917
          %v1074 = vadd.f32 %v1073, %v919
          %v1075 = vadd.f32 %v1074, %v921
          %v1076 = vrot.slane %v1075, 4
          %v1077 = vadd.f32 %v1075, %v1076
          %v1078 = vrot.slane %v1077, 2
          %v1079 = vadd.f32 %v1077, %v1078
          %v1080 = vrot.slane %v1079, 1
          %v1081 = vadd.f32 %v1079, %v1080
          %v1082 = vadd.f32 %v922, %v924
          %v1083 = vadd.f32 %v1082, %v926
          %v1084 = vadd.f32 %v1083, %v928
          %v1085 = vadd.f32 %v1084, %v930
          %v1086 = vadd.f32 %v1085, %v932
          %v1087 = vadd.f32 %v1086, %v934
          %v1088 = vadd.f32 %v1087, %v936
          %v1089 = vrot.slane %v1088, 4
          %v1090 = vadd.f32 %v1088, %v1089
          %v1091 = vrot.slane %v1090, 2
          %v1092 = vadd.f32 %v1090, %v1091
          %v1093 = vrot.slane %v1092, 1
          %v1094 = vadd.f32 %v1092, %v1093
          %v1095 = vadd.f32 %v923, %v925
          %v1096 = vadd.f32 %v1095, %v927
          %v1097 = vadd.f32 %v1096, %v929
          %v1098 = vadd.f32 %v1097, %v931
          %v1099 = vadd.f32 %v1098, %v933
          %v1100 = vadd.f32 %v1099, %v935
          %v1101 = vadd.f32 %v1100, %v937
          %v1102 = vrot.slane %v1101, 4
          %v1103 = vadd.f32 %v1101, %v1102
          %v1104 = vrot.slane %v1103, 2
          %v1105 = vadd.f32 %v1103, %v1104
          %v1106 = vrot.slane %v1105, 1
          %v1107 = vadd.f32 %v1105, %v1106
          %v1108 = vadd.f32 %v938, %v940
          %v1109 = vadd.f32 %v1108, %v942
          %v1110 = vadd.f32 %v1109, %v944
          %v1111 = vadd.f32 %v1110, %v946
          %v1112 = vadd.f32 %v1111, %v948
          %v1113 = vadd.f32 %v1112, %v950
          %v1114 = vadd.f32 %v1113, %v952
          %v1115 = vrot.slane %v1114, 4
          %v1116 = vadd.f32 %v1114, %v1115
          %v1117 = vrot.slane %v1116, 2
          %v1118 = vadd.f32 %v1116, %v1117
          %v1119 = vrot.slane %v1118, 1
          %v1120 = vadd.f32 %v1118, %v1119
          %v1121 = vadd.f32 %v939, %v941
          %v1122 = vadd.f32 %v1121, %v943
          %v1123 = vadd.f32 %v1122, %v945
          %v1124 = vadd.f32 %v1123, %v947
          %v1125 = vadd.f32 %v1124, %v949
          %v1126 = vadd.f32 %v1125, %v951
          %v1127 = vadd.f32 %v1126, %v953
          %v1128 = vrot.slane %v1127, 4
          %v1129 = vadd.f32 %v1127, %v1128
          %v1130 = vrot.slane %v1129, 2
          %v1131 = vadd.f32 %v1129, %v1130
          %v1132 = vrot.slane %v1131, 1
          %v1133 = vadd.f32 %v1131, %v1132
          %v1134 = vadd.f32 %v954, %v956
          %v1135 = vadd.f32 %v1134, %v958
          %v1136 = vadd.f32 %v1135, %v960
          %v1137 = vadd.f32 %v1136, %v962
          %v1138 = vadd.f32 %v1137, %v964
          %v1139 = vadd.f32 %v1138, %v966
          %v1140 = vadd.f32 %v1139, %v968
          %v1141 = vrot.slane %v1140, 4
          %v1142 = vadd.f32 %v1140, %v1141
          %v1143 = vrot.slane %v1142, 2
          %v1144 = vadd.f32 %v1142, %v1143
          %v1145 = vrot.slane %v1144, 1
          %v1146 = vadd.f32 %v1144, %v1145
          %v1147 = vadd.f32 %v955, %v957
          %v1148 = vadd.f32 %v1147, %v959
          %v1149 = vadd.f32 %v1148, %v961
          %v1150 = vadd.f32 %v1149, %v963
          %v1151 = vadd.f32 %v1150, %v965
          %v1152 = vadd.f32 %v1151, %v967
          %v1153 = vadd.f32 %v1152, %v969
          %v1154 = vrot.slane %v1153, 4
          %v1155 = vadd.f32 %v1153, %v1154
          %v1156 = vrot.slane %v1155, 2
          %v1157 = vadd.f32 %v1155, %v1156
          %v1158 = vrot.slane %v1157, 1
          %v1159 = vadd.f32 %v1157, %v1158
          %v1160 = vadd.f32 %v970, %v972
          %v1161 = vadd.f32 %v1160, %v974
          %v1162 = vadd.f32 %v1161, %v976
          %v1163 = vadd.f32 %v1162, %v978
          %v1164 = vadd.f32 %v1163, %v980
          %v1165 = vadd.f32 %v1164, %v982
          %v1166 = vadd.f32 %v1165, %v984
          %v1167 = vrot.slane %v1166, 4
          %v1168 = vadd.f32 %v1166, %v1167
          %v1169 = vrot.slane %v1168, 2
          %v1170 = vadd.f32 %v1168, %v1169
          %v1171 = vrot.slane %v1170, 1
          %v1172 = vadd.f32 %v1170, %v1171
          %v1173 = vadd.f32 %v971, %v973
          %v1174 = vadd.f32 %v1173, %v975
          %v1175 = vadd.f32 %v1174, %v977
          %v1176 = vadd.f32 %v1175, %v979
          %v1177 = vadd.f32 %v1176, %v981
          %v1178 = vadd.f32 %v1177, %v983
          %v1179 = vadd.f32 %v1178, %v985
          %v1180 = vrot.slane %v1179, 4
          %v1181 = vadd.f32 %v1179, %v1180
          %v1182 = vrot.slane %v1181, 2
          %v1183 = vadd.f32 %v1181, %v1182
          %v1184 = vrot.slane %v1183, 1
          %v1185 = vadd.f32 %v1183, %v1184
          %v1186 = vadd.f32 %v986, %v988
          %v1187 = vadd.f32 %v1186, %v990
          %v1188 = vadd.f32 %v1187, %v992
          %v1189 = vadd.f32 %v1188, %v994
          %v1190 = vadd.f32 %v1189, %v996
          %v1191 = vadd.f32 %v1190, %v998
          %v1192 = vadd.f32 %v1191, %v1000
          %v1193 = vrot.slane %v1192, 4
          %v1194 = vadd.f32 %v1192, %v1193
          %v1195 = vrot.slane %v1194, 2
          %v1196 = vadd.f32 %v1194, %v1195
          %v1197 = vrot.slane %v1196, 1
          %v1198 = vadd.f32 %v1196, %v1197
          %v1199 = vadd.f32 %v987, %v989
          %v1200 = vadd.f32 %v1199, %v991
          %v1201 = vadd.f32 %v1200, %v993
          %v1202 = vadd.f32 %v1201, %v995
          %v1203 = vadd.f32 %v1202, %v997
          %v1204 = vadd.f32 %v1203, %v999
          %v1205 = vadd.f32 %v1204, %v1001
          %v1206 = vrot.slane %v1205, 4
          %v1207 = vadd.f32 %v1205, %v1206
          %v1208 = vrot.slane %v1207, 2
          %v1209 = vadd.f32 %v1207, %v1208
          %v1210 = vrot.slane %v1209, 1
          %v1211 = vadd.f32 %v1209, %v1210
          %vm1228 = vcmask 1041409
          %v1229 = vsel %vm1228, %v1042, %v1016
          %vm1230 = vcmask 1042434
          %v1231 = vsel %vm1230, %v1068, %v1229
          %vm1232 = vcmask 1043459
          %v1233 = vsel %vm1232, %v1094, %v1231
          %vm1234 = vcmask 1044484
          %v1235 = vsel %vm1234, %v1120, %v1233
          %vm1236 = vcmask 1045509
          %v1237 = vsel %vm1236, %v1146, %v1235
          %vm1238 = vcmask 1046534
          %v1239 = vsel %vm1238, %v1172, %v1237
          %vm1240 = vcmask 1047559
          %v1241 = vsel %vm1240, %v1198, %v1239
          %v1242 = vsel %vm1228, %v1055, %v1029
          %v1243 = vsel %vm1230, %v1081, %v1242
          %v1244 = vsel %vm1232, %v1107, %v1243
          %v1245 = vsel %vm1234, %v1133, %v1244
          %v1246 = vsel %vm1236, %v1159, %v1245
          %v1247 = vsel %vm1238, %v1185, %v1246
          %v1248 = vsel %vm1240, %v1211, %v1247
          %v1251 = vadd.f32 %v1002, %v1241
          %v1252 = vadd.f32 %v1003, %v1248
          %1253 = vst [vmem:[#allocation2] sm:$0xff] %v1251
          %1254 = vst [vmem:[#allocation2 + $0x8] sm:$0xff] %v1252
          %v1255 = vld [vmem:[#allocation2] sm:$0xff]
          %v1256 = vld [vmem:[#allocation2 + $0x8] sm:$0xff]
          %v1257 = vmul.f32 %v1255, 0.005
          %v1258 = vmul.f32 %v1256, 0.005
          %v1259 = vld [vmem:[%s1] sm:$0xff]
          %v1260 = vld [vmem:[%s1 + $0x8] sm:$0xff]
          %v1261 = vld [vmem:[%s1 + $0x10] sm:$0xff]
          %v1262 = vld [vmem:[%s1 + $0x18] sm:$0xff]
          %v1263 = vld [vmem:[%s1 + $0x20] sm:$0xff]
          %v1264 = vld [vmem:[%s1 + $0x28] sm:$0xff]
          %v1265 = vld [vmem:[%s1 + $0x30] sm:$0xff]
          %v1266 = vld [vmem:[%s1 + $0x38] sm:$0xff]
          %v1267 = vld [vmem:[%s1 + $0x40] sm:$0xff]
          %v1268 = vld [vmem:[%s1 + $0x48] sm:$0xff]
          %v1269 = vld [vmem:[%s1 + $0x50] sm:$0xff]
          %v1270 = vld [vmem:[%s1 + $0x58] sm:$0xff]
          %v1271 = vld [vmem:[%s1 + $0x60] sm:$0xff]
          %v1272 = vld [vmem:[%s1 + $0x68] sm:$0xff]
          %v1273 = vld [vmem:[%s1 + $0x70] sm:$0xff]
          %v1274 = vld [vmem:[%s1 + $0x78] sm:$0xff]
          %v1275 = vld [vmem:[%s1 + $0x80] sm:$0xff]
          %v1276 = vld [vmem:[%s1 + $0x88] sm:$0xff]
          %v1277 = vld [vmem:[%s1 + $0x90] sm:$0xff]
          %v1278 = vld [vmem:[%s1 + $0x98] sm:$0xff]
          %v1279 = vld [vmem:[%s1 + $0xa0] sm:$0xff]
          %v1280 = vld [vmem:[%s1 + $0xa8] sm:$0xff]
          %v1281 = vld [vmem:[%s1 + $0xb0] sm:$0xff]
          %v1282 = vld [vmem:[%s1 + $0xb8] sm:$0xff]
          %v1283 = vld [vmem:[%s1 + $0xc0] sm:$0xff]
          %v1284 = vld [vmem:[%s1 + $0xc8] sm:$0xff]
          %v1285 = vld [vmem:[%s1 + $0xd0] sm:$0xff]
          %v1286 = vld [vmem:[%s1 + $0xd8] sm:$0xff]
          %v1287 = vld [vmem:[%s1 + $0xe0] sm:$0xff]
          %v1288 = vld [vmem:[%s1 + $0xe8] sm:$0xff]
          %v1289 = vld [vmem:[%s1 + $0xf0] sm:$0xff]
          %v1290 = vld [vmem:[%s1 + $0xf8] sm:$0xff]
          %v1291 = vld [vmem:[#allocation5] sm:$0x1]
          %v1293 = vlaneseq
          %v1294 = vshrl.u32 %v1293, 7
          %v1295 = vsub.s32 0, %v1294
          %v1296 = vrot.slane %v1291, %v1295
          %1298 = vmatprep.subr.mxu0 0.0
          %1299 = vmatpush1.msra.mxu0 %v1274
          %1300 = vmatprep.subr.mxu0 0.0
          %1301 = vmatpush1.msra.mxu0 %v1273
          %1302 = vmatprep.subr.mxu0 0.0
          %1303 = vmatpush1.msra.mxu0 %v1272
          %1304 = vmatprep.subr.mxu0 0.0
          %1305 = vmatpush1.msra.mxu0 %v1271
          %1306 = vmatprep.subr.mxu0 0.0
          %1307 = vmatpush1.msra.mxu0 %v1270
          %1308 = vmatprep.subr.mxu0 0.0
          %1309 = vmatpush1.msra.mxu0 %v1269
          %1310 = vmatprep.subr.mxu0 0.0
          %1311 = vmatpush1.msra.mxu0 %v1268
          %1312 = vmatprep.subr.mxu0 0.0
          %1313 = vmatpush1.msra.mxu0 %v1267
          %1314 = vmatprep.subr.mxu0 0.0
          %1315 = vmatpush1.msra.mxu0 %v1266
          %1316 = vmatprep.subr.mxu0 0.0
          %1317 = vmatpush1.msra.mxu0 %v1265
          %1318 = vmatprep.subr.mxu0 0.0
          %1319 = vmatpush1.msra.mxu0 %v1264
          %1320 = vmatprep.subr.mxu0 0.0
          %1321 = vmatpush1.msra.mxu0 %v1263
          %1322 = vmatprep.subr.mxu0 0.0
          %1323 = vmatpush1.msra.mxu0 %v1262
          %1324 = vmatprep.subr.mxu0 0.0
          %1325 = vmatpush1.msra.mxu0 %v1261
          %1326 = vmatprep.subr.mxu0 0.0
          %1327 = vmatpush1.msra.mxu0 %v1260
          %1328 = vmatprep.subr.mxu0 0.0
          %1329 = vmatpush1.msra.mxu0 %v1259
          %1330 = vmatprep.subr.mxu0 0.0
          %1331 = vmatpush2.msra.mxu0 %v1290
          %1332 = vmatprep.subr.mxu0 0.0
          %1333 = vmatpush2.msra.mxu0 %v1289
          %1334 = vmatprep.subr.mxu0 0.0
          %1335 = vmatpush2.msra.mxu0 %v1288
          %1336 = vmatprep.subr.mxu0 0.0
          %1337 = vmatpush2.msra.mxu0 %v1287
          %1338 = vmatprep.subr.mxu0 0.0
          %1339 = vmatpush2.msra.mxu0 %v1286
          %1340 = vmatprep.subr.mxu0 0.0
          %1341 = vmatpush2.msra.mxu0 %v1285
          %1342 = vmatprep.subr.mxu0 0.0
          %1343 = vmatpush2.msra.mxu0 %v1284
          %1344 = vmatprep.subr.mxu0 0.0
          %1345 = vmatpush2.msra.mxu0 %v1283
          %1346 = vmatprep.subr.mxu0 0.0
          %1347 = vmatpush2.msra.mxu0 %v1282
          %1348 = vmatprep.subr.mxu0 0.0
          %1349 = vmatpush2.msra.mxu0 %v1281
          %1350 = vmatprep.subr.mxu0 0.0
          %1351 = vmatpush2.msra.mxu0 %v1280
          %1352 = vmatprep.subr.mxu0 0.0
          %1353 = vmatpush2.msra.mxu0 %v1279
          %1354 = vmatprep.subr.mxu0 0.0
          %1355 = vmatpush2.msra.mxu0 %v1278
          %1356 = vmatprep.subr.mxu0 0.0
          %1357 = vmatpush2.msra.mxu0 %v1277
          %1358 = vmatprep.subr.mxu0 0.0
          %1359 = vmatpush2.msra.mxu0 %v1276
          %1360 = vmatprep.subr.mxu0 0.0
          %1361 = vmatpush2.msra.mxu0 %v1275
          %1362 = vmatprep.mubr.f32.mxu0 %v1258
          %1363 = vmatmul.mubr.f32.gmra.mxu0 %v1257
          %v1364 = vpop.f32.mrf.mxu0
          %v1365 = vadd.f32 %v1296, %v1364
          %v1366 = vpop.f32.mrf.mxu0
          %1367 = vdwg.mxu0
          %v1368 = vmax.f32 %v1365, 0.0
          %v1369 = vld [vmem:[%s3] sm:$0xff]
          %v1370 = vld [vmem:[%s3 + $0x8] sm:$0xff]
          %v1371 = vld [vmem:[%s3 + $0x10] sm:$0xff]
          %v1372 = vld [vmem:[%s3 + $0x18] sm:$0xff]
          %v1373 = vld [vmem:[%s3 + $0x20] sm:$0xff]
          %v1374 = vld [vmem:[%s3 + $0x28] sm:$0xff]
          %v1375 = vld [vmem:[%s3 + $0x30] sm:$0xff]
          %v1376 = vld [vmem:[%s3 + $0x38] sm:$0xff]
          %v1377 = vld [vmem:[#allocation7] sm:$0x1]
          %v1379 = vlaneseq
          %v1380 = vshrl.u32 %v1379, 7
          %v1381 = vsub.s32 0, %v1380
          %v1382 = vrot.slane %v1377, %v1381
          %vm1384 = vcmask 523264
          %v1386 = vsel %vm1384, %v1368, 0
          %1388 = vmatprep.subr.mxu0 0.0
          %1389 = vmatpush1.msra.mxu0 0.0
          %1390 = vmatprep.subr.mxu0 0.0
          %1391 = vmatpush1.msra.mxu0 0.0
          %1392 = vmatprep.subr.mxu0 0.0
          %1393 = vmatpush1.msra.mxu0 0.0
          %1394 = vmatprep.subr.mxu0 0.0
          %1395 = vmatpush1.msra.mxu0 0.0
          %1396 = vmatprep.subr.mxu0 0.0
          %1397 = vmatpush1.msra.mxu0 0.0
          %1398 = vmatprep.subr.mxu0 0.0
          %1399 = vmatpush1.msra.mxu0 0.0
          %1400 = vmatprep.subr.mxu0 0.0
          %1401 = vmatpush1.msra.mxu0 0.0
          %1402 = vmatprep.subr.mxu0 0.0
          %1403 = vmatpush1.msra.mxu0 0.0
          %1404 = vmatprep.subr.mxu0 0.0
          %1405 = vmatpush1.msra.mxu0 %v1376
          %1406 = vmatprep.subr.mxu0 0.0
          %1407 = vmatpush1.msra.mxu0 %v1375
          %1408 = vmatprep.subr.mxu0 0.0
          %1409 = vmatpush1.msra.mxu0 %v1374
          %1410 = vmatprep.subr.mxu0 0.0
          %1411 = vmatpush1.msra.mxu0 %v1373
          %1412 = vmatprep.subr.mxu0 0.0
          %1413 = vmatpush1.msra.mxu0 %v1372
          %1414 = vmatprep.subr.mxu0 0.0
          %1415 = vmatpush1.msra.mxu0 %v1371
          %1416 = vmatprep.subr.mxu0 0.0
          %1417 = vmatpush1.msra.mxu0 %v1370
          %1418 = vmatprep.subr.mxu0 0.0
          %1419 = vmatpush1.msra.mxu0 %v1369
          %1420 = vmatprep.subr.mxu0 0.0
          %1421 = vmatpush2.msra.mxu0 0.0
          %1422 = vmatprep.subr.mxu0 0.0
          %1423 = vmatpush2.msra.mxu0 0.0
          %1424 = vmatprep.subr.mxu0 0.0
          %1425 = vmatpush2.msra.mxu0 0.0
          %1426 = vmatprep.subr.mxu0 0.0
          %1427 = vmatpush2.msra.mxu0 0.0
          %1428 = vmatprep.subr.mxu0 0.0
          %1429 = vmatpush2.msra.mxu0 0.0
          %1430 = vmatprep.subr.mxu0 0.0
          %1431 = vmatpush2.msra.mxu0 0.0
          %1432 = vmatprep.subr.mxu0 0.0
          %1433 = vmatpush2.msra.mxu0 0.0
          %1434 = vmatprep.subr.mxu0 0.0
          %1435 = vmatpush2.msra.mxu0 0.0
          %1436 = vmatprep.subr.mxu0 0.0
          %1437 = vmatpush2.msra.mxu0 0.0
          %1438 = vmatprep.subr.mxu0 0.0
          %1439 = vmatpush2.msra.mxu0 0.0
          %1440 = vmatprep.subr.mxu0 0.0
          %1441 = vmatpush2.msra.mxu0 0.0
          %1442 = vmatprep.subr.mxu0 0.0
          %1443 = vmatpush2.msra.mxu0 0.0
          %1444 = vmatprep.subr.mxu0 0.0
          %1445 = vmatpush2.msra.mxu0 0.0
          %1446 = vmatprep.subr.mxu0 0.0
          %1447 = vmatpush2.msra.mxu0 0.0
          %1448 = vmatprep.subr.mxu0 0.0
          %1449 = vmatpush2.msra.mxu0 0.0
          %1450 = vmatprep.subr.mxu0 0.0
          %1451 = vmatpush2.msra.mxu0 0.0
          %1452 = vmatprep.mubr.f32.mxu0 0.0
          %1453 = vmatmul.mubr.f32.gmra.mxu0 %v1386
          %v1454 = vpop.f32.mrf.mxu0
          %v1455 = vadd.f32 %v1382, %v1454
          %v1456 = vpop.f32.mrf.mxu0
          %1457 = vdwg.mxu0
          %v1458 = vxor.u32 %v1455, 2147483648
          %v1459 = vmul.f32 %v1458, 1.442695
          %v1460 = vpow.pop %v1459
          %v1461 = vadd.f32 %v1460, 1.0
          %v1462 = vrcp.pop %v1461
          %v1463 = vmul.f32 1.0, %v1462
          %v1464 = vmul.f32 %v1463, 2.0
          %v1465 = vsub.f32 %v1464, 1.0
          %vm1466 = vcmask 31744
          %1467 = vst.msk [vmem:[%s333] sm:$0xff] %vm1466, %v1465
        $region64: #{tpu_custom_call.1} parent=39 // pred_fallthru
          _
        %p1468 = scmp.lt.s32.totalorder %s24, 1
        %s1469 = scalar_select %p1468, %s24, 1
        %s1470 = smul.addr %s1469, 8
        %s1471 = scalar_lea.vmem %s5, %s1470
        // Predicated region
        $region65: #{tpu_custom_call.1} parent=39 // pred_check
          %p1472 = pneg %p162
        $region66: #{tpu_custom_call.1} parent=39 // pred_check_branch
          %1474 = sbr.rel (%p1472) target = $region68
        $region67: #{tpu_custom_call.1} parent=39 // pred_region
          _
        $region68: #{tpu_custom_call.1} parent=39 // pred_fallthru
          _
      $region40: #{tpu_custom_call.1} parent=5 // pred_fallthru
        _
      %p1475 = scmp.le.s32.totalorder 2, %s15
      // Predicated region
      $region69: #{tpu_custom_call.1} parent=5 // pred_check
        %p1476 = pneg %p1475
      $region70: #{tpu_custom_call.1} parent=5 // pred_check_branch
        %1478 = sbr.rel (%p1476) target = $region72
      $region71: #{tpu_custom_call.1} parent=5 // pred_region
        %s1479 = ssub.s32 %s15, 2
        // Predicated region
        $region73: #{tpu_custom_call.1} parent=71 // pred_check
          %p1480 = pneg %p168
        $region74: #{tpu_custom_call.1} parent=71 // pred_check_branch
          %1482 = sbr.rel (%p1480) target = $region76
        $region75: #{tpu_custom_call.1} parent=71 // pred_region
          %p1483 = scmp.lt.s32.totalorder %s26, 1
          %s1484 = scalar_select %p1483, %s26, 1
          %s1485 = smul.addr %s1484, 8
          %s1486 = scalar_lea.vmem %s5, %s1485
        $region76: #{tpu_custom_call.1} parent=71 // pred_fallthru
          _
      $region72: #{tpu_custom_call.1} parent=5 // pred_fallthru
        _
    $region6: #{tpu_custom_call.1} parent=1 // loop_footer
      %s19 = sadd.s32 1, %s15
    $region7: #{tpu_custom_call.1} parent=1 // loop_footer_branch
      %14 = sbr.rel target = $region3
    $region8: #{tpu_custom_call.1} parent=1 // loop_exit
      _
    %1487 = vsyncpa [#allocation4], 1
    %s1488 = scalar_lea.sflag [#allocation4], 1
    %1489 = vsyncpa %s1488, 1
    %1490 = vsyncpa [#allocation6], 1

</llo_original>
